<compile_context>
chip_gen: v7x
topology: tpu7x:2x2x1
jax: 0.10.0
libtpu: 0.0.40
codegen_flags: <defaults>
</compile_context>

<pallas_src>
import functools

import jax
import jax.numpy as jnp
from jax import lax
from jax.experimental import pallas as pl
from jax.experimental.pallas import tpu as pltpu


_VMEM_LIMIT = 48 * 1024 * 1024  # safe on v7x (64 MiB physical), fine on v5e/v6e


def _round_up(x, m):
    return (x + m - 1) // m * m


# ----------------------------- Pallas kernels ------------------------------

def _bgemm_bias_kernel(a_ref, b_ref, bias_ref, o_ref, acc_ref):
    """Batched (over parity) GEMM: O[g] = A[g] @ B[g] + bias, f32 accumulate."""
    k = pl.program_id(3)

    @pl.when(k == 0)
    def _():
        acc_ref[...] = jnp.zeros_like(acc_ref)

    acc_ref[...] += jnp.dot(a_ref[0], b_ref[0],
                            preferred_element_type=jnp.float32)

    @pl.when(k == pl.num_programs(3) - 1)
    def _():
        o_ref[0] = (acc_ref[...] + bias_ref[...]).astype(o_ref.dtype)


def pallas_batched_gemm_bias(a, b, bias):
    """O[g] = A[g] @ B[g] + bias.  A:(G,M,K), B:(G,K,N), bias:(N,).

    Operands are cast to bf16 for the MXU; accumulation/output stay f32.
    Tile sizes are chosen per call so tiny M/K/N are not padded excessively.
    """
    a = a.astype(jnp.bfloat16)
    b = b.astype(jnp.bfloat16)
    bias = bias.astype(jnp.float32)

    G, M, K = a.shape
    _, _, N = b.shape

    # Adaptive tiles: multiples of (16, 128) for bf16 blocks, capped for VMEM.
    tm = min(256, _round_up(M, 16))
    tn = min(256, _round_up(N, 128))
    tk = min(2048, _round_up(K, 128))

    Mp, Kp, Np = _round_up(M, tm), _round_up(K, tk), _round_up(N, tn)
    a_p = jnp.pad(a, ((0, 0), (0, Mp - M), (0, Kp - K)))
    b_p = jnp.pad(b, ((0, 0), (0, Kp - K), (0, Np - N)))
    bias_p = jnp.pad(bias.reshape(1, -1), ((0, 0), (0, Np - N)))

    out = pl.pallas_call(
        _bgemm_bias_kernel,
        out_shape=jax.ShapeDtypeStruct((G, Mp, Np), jnp.float32),
        grid_spec=pltpu.PrefetchScalarGridSpec(
            num_scalar_prefetch=0,
            grid=(G, Mp // tm, Np // tn, Kp // tk),
            in_specs=[
                pl.BlockSpec((1, tm, tk), lambda g, i, j, k: (g, i, k)),
                pl.BlockSpec((1, tk, tn), lambda g, i, j, k: (g, k, j)),
                pl.BlockSpec((1, tn), lambda g, i, j, k: (0, j)),
            ],
            out_specs=pl.BlockSpec((1, tm, tn), lambda g, i, j, k: (g, i, j)),
            scratch_shapes=[pltpu.VMEM((tm, tn), jnp.float32)]),
        compiler_params=pltpu.CompilerParams(
            dimension_semantics=("parallel", "parallel", "parallel",
                                 "arbitrary"),
            vmem_limit_bytes=_VMEM_LIMIT),
    )(a_p, b_p, bias_p)
    return out[:, :M, :N]


def _in_relu_concat_kernel(y_ref, s_ref, o_ref, *, c_out, eps):
    """InstanceNorm(affine=False) + ReLU on y, skip written into o[..., c_out:]."""
    y = y_ref[0]                                   # (H*W, C)
    mean = jnp.mean(y, axis=0, keepdims=True)
    yc = y - mean
    var = jnp.mean(yc * yc, axis=0, keepdims=True)  # biased var (PyTorch IN)
    yn = jnp.maximum(yc * lax.rsqrt(var + eps), 0.0)
    o_ref[0, :, :c_out] = yn.astype(o_ref.dtype)
    o_ref[0, :, c_out:] = s_ref[0].astype(o_ref.dtype)


def pallas_instance_norm_relu_concat(y, skip, eps=1e-5):
    """Fused InstanceNorm2d + ReLU + channel concat (NHWC)."""
    N, H, W, C = y.shape
    _, _, _, Cs = skip.shape
    HW = H * W
    out = pl.pallas_call(
        functools.partial(_in_relu_concat_kernel, c_out=C, eps=eps),
        out_shape=jax.ShapeDtypeStruct((N, HW, C + Cs), jnp.float32),
        grid=(N,),
        in_specs=[pl.BlockSpec((1, HW, C), lambda n: (n, 0, 0)),
                  pl.BlockSpec((1, HW, Cs), lambda n: (n, 0, 0))],
        out_specs=pl.BlockSpec((1, HW, C + Cs), lambda n: (n, 0, 0)),
        compiler_params=pltpu.CompilerParams(
            dimension_semantics=("parallel",),
            vmem_limit_bytes=_VMEM_LIMIT),
    )(y.reshape(N, HW, C), skip.reshape(N, HW, Cs))
    return out.reshape(N, H, W, C + Cs)


def _in_relu_kernel(y_ref, o_ref, *, eps):
    y = y_ref[0]
    mean = jnp.mean(y, axis=0, keepdims=True)
    yc = y - mean
    var = jnp.mean(yc * yc, axis=0, keepdims=True)
    o_ref[0] = jnp.maximum(yc * lax.rsqrt(var + eps), 0.0).astype(o_ref.dtype)


def pallas_instance_norm_relu(y, eps=1e-5):
    """Fallback (no fused concat) for lane-unaligned channel counts."""
    N, H, W, C = y.shape
    HW = H * W
    out = pl.pallas_call(
        functools.partial(_in_relu_kernel, eps=eps),
        out_shape=jax.ShapeDtypeStruct((N, HW, C), jnp.float32),
        grid=(N,),
        in_specs=[pl.BlockSpec((1, HW, C), lambda n: (n, 0, 0))],
        out_specs=pl.BlockSpec((1, HW, C), lambda n: (n, 0, 0)),
        compiler_params=pltpu.CompilerParams(
            dimension_semantics=("parallel",),
            vmem_limit_bytes=_VMEM_LIMIT),
    )(y.reshape(N, HW, C))
    return out.reshape(N, H, W, C)


# ------------------------------ JAX glue ------------------------------------

# Sub-pixel (parity) decomposition of ConvTranspose2d(k=4, s=2, p=1):
#   out[2r+p, 2c+q] = sum over 2x2 taps of  xp[r+ro, c+co] @ W[:, :, kh, kw]
# with xp = pad(x, 1) and the (offset, kernel-index) pairs per parity below
# (identical table for rows/p and cols/q).
_PARITY_TAPS = {0: ((1, 1), (0, 3)),     # parity 0: (xp offset, k index)
                1: ((2, 0), (1, 2))}     # parity 1


def unet_up(x, skip, w, b):
    """ConvTranspose2d(4,2,1,bias) + InstanceNorm2d + ReLU, concat skip (NHWC).

    x: (N,H,W,Cin), skip: (N,2H,2W,Cs), w: PyTorch ConvT weight (Cin,Cout,4,4).
    """
    N, H, W, Cin = x.shape
    Cout = w.shape[1]
    xp = jnp.pad(x, ((0, 0), (1, 1), (1, 1), (0, 0)))

    a_par, b_par = [], []
    for p in range(2):
        for q in range(2):
            taps, wtaps = [], []
            for ro, kh in _PARITY_TAPS[p]:
                for co, kw in _PARITY_TAPS[q]:
                    taps.append(xp[:, ro:ro + H, co:co + W, :]
                                .reshape(N * H * W, Cin))
                    wtaps.append(w[:, :, kh, kw])           # (Cin, Cout)
            a_par.append(jnp.concatenate(taps, axis=-1))    # (M, 4*Cin)
            b_par.append(jnp.concatenate(wtaps, axis=0))    # (4*Cin, Cout)

    a = jnp.stack(a_par, axis=0)                            # (4, M, 4*Cin)
    bm = jnp.stack(b_par, axis=0)                           # (4, 4*Cin, Cout)

    # Bias is kept for fidelity even though InstanceNorm cancels it exactly.
    y4 = pallas_batched_gemm_bias(a, bm, b)                 # (4, M, Cout) f32

    # Interleave the 4 sub-pixel outputs: (p, q, n, r, c, C) -> (n, 2r+p, 2c+q, C)
    y = y4.reshape(2, 2, N, H, W, Cout).transpose(2, 3, 0, 4, 1, 5)
    y = y.reshape(N, 2 * H, 2 * W, Cout)

    # InstanceNorm + ReLU (+ fused skip concat when the channel offset is
    # lane-aligned).
    # TODO(synk): for very large H*W*C the per-batch single-block norm should
    # be replaced by a spatially tiled two-pass reduction.
    if Cout % 128 == 0:
        return pallas_instance_norm_relu_concat(y, skip)
    y = pallas_instance_norm_relu(y)
    return jnp.concatenate([y, skip], axis=-1)


def unet_up_forward(params, x_nchw, skip_nchw):
    """PyTorch-layout wrapper: NCHW in, NCHW out."""
    x = jnp.transpose(x_nchw, (0, 2, 3, 1))
    skip = jnp.transpose(skip_nchw, (0, 2, 3, 1))
    out = unet_up(x, skip, params["w"], params["b"])
    return jnp.transpose(out, (0, 3, 1, 2))


# --------------------------- pure-JAX reference ------------------------------

def _reference_forward(params, x_nchw, skip_nchw):
    w, b = params["w"], params["b"]
    # ConvT(s=2,p=1,k=4) == conv(lhs_dilation=2, pad=2, flipped kernel, io swap)
    wf = jnp.transpose(w, (1, 0, 2, 3))[:, :, ::-1, ::-1]   # (Cout,Cin,kh,kw)
    y = lax.conv_general_dilated(
        x_nchw, wf, window_strides=(1, 1), padding=((2, 2), (2, 2)),
        lhs_dilation=(2, 2), dimension_numbers=("NCHW", "OIHW", "NCHW"))
    y = y + b[None, :, None, None]
    mean = jnp.mean(y, axis=(2, 3), keepdims=True)
    var = jnp.mean((y - mean) ** 2, axis=(2, 3), keepdims=True)
    y = jnp.maximum((y - mean) * lax.rsqrt(var + 1e-5), 0.0)
    return jnp.concatenate([y, skip_nchw], axis=1)


# -------------------------------- main ---------------------------------------

if __name__ == "__main__":
    key = jax.random.PRNGKey(0)
    k1, k2, k3, k4 = jax.random.split(key, 4)

    # Small shapes shaped like a mid-level UNetUp block (lane-aligned channels).
    Nb, Cin, Cout, Cskip, H, W = 2, 256, 128, 128, 8, 8
    x = jax.random.normal(k1, (Nb, Cin, H, W), jnp.float32)
    skip = jax.random.normal(k2, (Nb, Cskip, 2 * H, 2 * W), jnp.float32)
    params = {
        "w": 0.02 * jax.random.normal(k3, (Cin, Cout, 4, 4), jnp.float32),
        "b": 0.02 * jax.random.normal(k4, (Cout,), jnp.float32),
    }

    fwd = jax.jit(unet_up_forward)
    out = jax.block_until_ready(fwd(params, x, skip))

    assert out.shape == (Nb, Cout + Cskip, 2 * H, 2 * W), out.shape
    assert out.dtype == jnp.float32
    assert bool(jnp.all(jnp.isfinite(out)))

    # Correctness vs. pure-JAX f32 reference (bf16 GEMM operands => small drift).
    ref = _reference_forward(params, x, skip)
    max_err = float(jnp.max(jnp.abs(out - ref)))
    assert max_err < 0.1, f"max abs err {max_err}"

    print("KERNEL_OK")
</pallas_src>

<mosaic_0001>
module attributes {stable_mosaic.version = 11 : i64} {
  func.func @_bgemm_bias_kernel(%arg0: i32, %arg1: i32, %arg2: i32, %arg3: i32, %arg4: memref<1x128x1024xbf16, #tpu.memory_space<vmem>>, %arg5: memref<1x1024x128xbf16, #tpu.memory_space<vmem>>, %arg6: memref<1x128xf32, #tpu.memory_space<vmem>>, %arg7: memref<1x128x128xf32, #tpu.memory_space<vmem>>, %arg8: memref<128x128xf32, #tpu.memory_space<vmem>>) attributes {dimension_semantics = [#tpu.dimension_semantics<parallel>, #tpu.dimension_semantics<parallel>, #tpu.dimension_semantics<parallel>, #tpu.dimension_semantics<arbitrary>], iteration_bounds = array<i64: 4, 1, 1, 1>, scalar_prefetch = 0 : i64, scratch_operands = 1 : i64, tpu.core_type = #tpu.core_type<tc>, window_params = [{transform_indices = @transform_0, window_bounds = array<i64: 1, 128, 1024>}, {transform_indices = @transform_1, window_bounds = array<i64: 1, 1024, 128>}, {transform_indices = @transform_2, window_bounds = array<i64: 1, 128>}, {transform_indices = @transform_3, window_bounds = array<i64: 1, 128, 128>}]} {
    %c0_i32 = arith.constant 0 : i32
    %0 = arith.cmpi eq, %arg3, %c0_i32 : i32
    %1 = arith.extui %0 : i1 to i32
    %c0_i32_0 = arith.constant 0 : i32
    %2 = arith.cmpi ne, %1, %c0_i32_0 : i32
    scf.if %2 {
      %cst_12 = arith.constant 0.000000e+00 : f32
      %14 = vector.broadcast %cst_12 : f32 to vector<128x128xf32>
      %c0_13 = arith.constant 0 : index
      %c0_14 = arith.constant 0 : index
      %15 = vector.load %arg8[%c0_13, %c0_14] : memref<128x128xf32, #tpu.memory_space<vmem>>, vector<128x128xf32>
      tpu.vector_store %arg8[%c0_13, %c0_14], %14 {strides = array<i32>} : memref<128x128xf32, #tpu.memory_space<vmem>>, vector<128x128xf32>,
    } else {
    }
    %c0 = arith.constant 0 : index
    %c0_1 = arith.constant 0 : index
    %3 = vector.load %arg8[%c0, %c0_1] : memref<128x128xf32, #tpu.memory_space<vmem>>, vector<128x128xf32>
    %c0_2 = arith.constant 0 : index
    %c0_3 = arith.constant 0 : index
    %c0_4 = arith.constant 0 : index
    %4 = vector.load %arg4[%c0_2, %c0_3, %c0_4] : memref<1x128x1024xbf16, #tpu.memory_space<vmem>>, vector<1x128x1024xbf16>
    %5 = vector.shape_cast %4 : vector<1x128x1024xbf16> to vector<128x1024xbf16>
    %c0_5 = arith.constant 0 : index
    %c0_6 = arith.constant 0 : index
    %c0_7 = arith.constant 0 : index
    %6 = vector.load %arg5[%c0_5, %c0_6, %c0_7] : memref<1x1024x128xbf16, #tpu.memory_space<vmem>>, vector<1x1024x128xbf16>
    %7 = vector.shape_cast %6 : vector<1x1024x128xbf16> to vector<1024x128xbf16>
    %cst = arith.constant dense<0.000000e+00> : vector<128x128xf32>
    %8 = tpu.matmul %5, %7, %cst {dimension_numbers = #tpu.dot_dimension_numbers<[1], [0], [0], [1], [0, 0, 1, 1], [], []>} : vector<128x1024xbf16>, vector<1024x128xbf16>, vector<128x128xf32> -> vector<128x128xf32>
    %9 = arith.addf %3, %8 : vector<128x128xf32>
    %c0_8 = arith.constant 0 : index
    %c0_9 = arith.constant 0 : index
    %10 = vector.load %arg8[%c0_8, %c0_9] : memref<128x128xf32, #tpu.memory_space<vmem>>, vector<128x128xf32>
    tpu.vector_store %arg8[%c0_8, %c0_9], %9 {strides = array<i32>} : memref<128x128xf32, #tpu.memory_space<vmem>>, vector<128x128xf32>,
    %c0_i32_10 = arith.constant 0 : i32
    %11 = arith.cmpi eq, %arg3, %c0_i32_10 : i32
    %12 = arith.extui %11 : i1 to i32
    %c0_i32_11 = arith.constant 0 : i32
    %13 = arith.cmpi ne, %12, %c0_i32_11 : i32
    scf.if %13 {
      %c0_12 = arith.constant 0 : index
      %c0_13 = arith.constant 0 : index
      %14 = vector.load %arg8[%c0_12, %c0_13] : memref<128x128xf32, #tpu.memory_space<vmem>>, vector<128x128xf32>
      %c0_14 = arith.constant 0 : index
      %c0_15 = arith.constant 0 : index
      %15 = vector.load %arg6[%c0_14, %c0_15] : memref<1x128xf32, #tpu.memory_space<vmem>>, vector<1x128xf32>
      %16 = vector.broadcast %15 : vector<1x128xf32> to vector<128x128xf32>
      %17 = arith.addf %14, %16 : vector<128x128xf32>
      %c0_16 = arith.constant 0 : index
      %c0_17 = arith.constant 0 : index
      %c0_18 = arith.constant 0 : index
      %18 = vector.load %arg7[%c0_16, %c0_17, %c0_18] : memref<1x128x128xf32, #tpu.memory_space<vmem>>, vector<1x128x128xf32>
      %19 = vector.shape_cast %18 : vector<1x128x128xf32> to vector<128x128xf32>
      %20 = vector.shape_cast %17 : vector<128x128xf32> to vector<1x128x128xf32>
      tpu.vector_store %arg7[%c0_16, %c0_17, %c0_18], %20 {strides = array<i32>} : memref<1x128x128xf32, #tpu.memory_space<vmem>>, vector<1x128x128xf32>,
    } else {
    }
    return
  }
  func.func @transform_0(%arg0: i32, %arg1: i32, %arg2: i32, %arg3: i32) -> (i32, i32, i32) {
    %c0_i32 = arith.constant 0 : i32
    return %arg0, %arg1, %arg3 : i32, i32, i32
  }
  func.func @transform_1(%arg0: i32, %arg1: i32, %arg2: i32, %arg3: i32) -> (i32, i32, i32) {
    %c0_i32 = arith.constant 0 : i32
    return %arg0, %arg3, %arg2 : i32, i32, i32
  }
  func.func @transform_2(%arg0: i32, %arg1: i32, %arg2: i32, %arg3: i32) -> (i32, i32) {
    %c0_i32 = arith.constant 0 : i32
    %c0_i32_0 = arith.constant 0 : i32
    return %c0_i32, %arg2 : i32, i32
  }
  func.func @transform_3(%arg0: i32, %arg1: i32, %arg2: i32, %arg3: i32) -> (i32, i32, i32) {
    %c0_i32 = arith.constant 0 : i32
    return %arg0, %arg1, %arg2 : i32, i32, i32
  }
}

module attributes {stable_mosaic.version = 11 : i64} {
  func.func @_in_relu_concat_kernel(%arg0: i32, %arg1: memref<1x256x128xf32, #tpu.memory_space<vmem>>, %arg2: memref<1x256x128xf32, #tpu.memory_space<vmem>>, %arg3: memref<1x256x256xf32, #tpu.memory_space<vmem>>) attributes {dimension_semantics = [#tpu.dimension_semantics<parallel>], iteration_bounds = array<i64: 2>, scalar_prefetch = 0 : i64, scratch_operands = 0 : i64, tpu.core_type = #tpu.core_type<tc>, window_params = [{transform_indices = @transform_0, window_bounds = array<i64: 1, 256, 128>}, {transform_indices = @transform_1, window_bounds = array<i64: 1, 256, 128>}, {transform_indices = @transform_2, window_bounds = array<i64: 1, 256, 256>}]} {
    %c0 = arith.constant 0 : index
    %c0_0 = arith.constant 0 : index
    %c0_1 = arith.constant 0 : index
    %0 = vector.load %arg1[%c0, %c0_0, %c0_1] : memref<1x256x128xf32, #tpu.memory_space<vmem>>, vector<1x256x128xf32>
    %1 = vector.shape_cast %0 : vector<1x256x128xf32> to vector<256x128xf32>
    %cst = arith.constant dense<0.000000e+00> : vector<128xf32>
    %2 = vector.multi_reduction <add>, %1, %cst [0] : vector<256x128xf32> to vector<128xf32>
    %3 = vector.shape_cast %2 : vector<128xf32> to vector<1x128xf32>
    %cst_2 = arith.constant 2.560000e+02 : f32
    %4 = vector.broadcast %cst_2 : f32 to vector<1x128xf32>
    %5 = arith.divf %3, %4 : vector<1x128xf32>
    %6 = vector.broadcast %5 : vector<1x128xf32> to vector<256x128xf32>
    %7 = arith.subf %1, %6 : vector<256x128xf32>
    %8 = arith.mulf %7, %7 : vector<256x128xf32>
    %cst_3 = arith.constant dense<0.000000e+00> : vector<128xf32>
    %9 = vector.multi_reduction <add>, %8, %cst_3 [0] : vector<256x128xf32> to vector<128xf32>
    %10 = vector.shape_cast %9 : vector<128xf32> to vector<1x128xf32>
    %cst_4 = arith.constant 2.560000e+02 : f32
    %11 = vector.broadcast %cst_4 : f32 to vector<1x128xf32>
    %12 = arith.divf %10, %11 : vector<1x128xf32>
    %cst_5 = arith.constant 9.99999974E-6 : f32
    %13 = vector.broadcast %cst_5 : f32 to vector<1x128xf32>
    %14 = arith.addf %12, %13 : vector<1x128xf32>
    %15 = math.rsqrt %14 : vector<1x128xf32>
    %16 = vector.broadcast %15 : vector<1x128xf32> to vector<256x128xf32>
    %17 = arith.mulf %7, %16 : vector<256x128xf32>
    %cst_6 = arith.constant 0.000000e+00 : f32
    %18 = vector.broadcast %cst_6 : f32 to vector<256x128xf32>
    %19 = arith.maximumf %17, %18 : vector<256x128xf32>
    %c0_7 = arith.constant 0 : index
    %c0_8 = arith.constant 0 : index
    %c0_9 = arith.constant 0 : index
    %20 = vector.load %arg3[%c0_7, %c0_8, %c0_9] : memref<1x256x256xf32, #tpu.memory_space<vmem>>, vector<1x256x128xf32>
    %21 = vector.shape_cast %20 : vector<1x256x128xf32> to vector<256x128xf32>
    %22 = vector.shape_cast %19 : vector<256x128xf32> to vector<1x256x128xf32>
    tpu.vector_store %arg3[%c0_7, %c0_8, %c0_9], %22 {strides = array<i32>} : memref<1x256x256xf32, #tpu.memory_space<vmem>>, vector<1x256x128xf32>,
    %c0_10 = arith.constant 0 : index
    %c0_11 = arith.constant 0 : index
    %c0_12 = arith.constant 0 : index
    %23 = vector.load %arg2[%c0_10, %c0_11, %c0_12] : memref<1x256x128xf32, #tpu.memory_space<vmem>>, vector<1x256x128xf32>
    %24 = vector.shape_cast %23 : vector<1x256x128xf32> to vector<256x128xf32>
    %c0_13 = arith.constant 0 : index
    %c0_14 = arith.constant 0 : index
    %c128 = arith.constant 128 : index
    %25 = vector.load %arg3[%c0_13, %c0_14, %c128] : memref<1x256x256xf32, #tpu.memory_space<vmem>>, vector<1x256x128xf32>
    %26 = vector.shape_cast %25 : vector<1x256x128xf32> to vector<256x128xf32>
    %27 = vector.shape_cast %24 : vector<256x128xf32> to vector<1x256x128xf32>
    tpu.vector_store %arg3[%c0_13, %c0_14, %c128], %27 {strides = array<i32>} : memref<1x256x256xf32, #tpu.memory_space<vmem>>, vector<1x256x128xf32>,
    return
  }
  func.func @transform_0(%arg0: i32) -> (i32, i32, i32) {
    %c0_i32 = arith.constant 0 : i32
    %c0_i32_0 = arith.constant 0 : i32
    %c0_i32_1 = arith.constant 0 : i32
    return %arg0, %c0_i32, %c0_i32_0 : i32, i32, i32
  }
  func.func @transform_1(%arg0: i32) -> (i32, i32, i32) {
    %c0_i32 = arith.constant 0 : i32
    %c0_i32_0 = arith.constant 0 : i32
    %c0_i32_1 = arith.constant 0 : i32
    return %arg0, %c0_i32, %c0_i32_0 : i32, i32, i32
  }
  func.func @transform_2(%arg0: i32) -> (i32, i32, i32) {
    %c0_i32 = arith.constant 0 : i32
    %c0_i32_0 = arith.constant 0 : i32
    %c0_i32_1 = arith.constant 0 : i32
    return %arg0, %c0_i32, %c0_i32_0 : i32, i32, i32
  }
}

</mosaic_0001>

<llo_original>
// kernel: unet_up_forward.3
$region0: #{unet_up_forward.3}
  #allocation0 [shape = 'u32[]', space=smem, size = 0x4, offset = 0x4, fixed_abs, tag = 'smem constant byte address 0x4 - core index']
  #allocation1 [shape = 'u32[144,128]{1,0:T(1,128)}', space=vmem, size = 0x12000, scoped, tag = 'internal scratch']
  %s0 = inlined_call_operand.vmem [shape: f32[2,256,128], index: 0, kind: input, shape index: {}]
  %s1 = inlined_call_operand.vmem [shape: f32[2,256,128], index: 1, kind: input, shape index: {}]
  %s2 = inlined_call_operand.hbm [shape: f32[2,256,256], index: 2, kind: output, shape index: {}]
  %s3 = sld [smem:[#allocation0]]
  $region41: #{unet_up_forward.3} parent=0
    _
  %s5 = ssub.s32 1, %s3
  %s6 = scalar_select 0, %s5, %s3
  $region1: #{unet_up_forward.3} parent=0
    #allocation2 [shape = 'u8[524288]{0}', space=vmem, size = 0x80000, scoped, tag = 'output window, operand 0']
    #allocation3 [shape = 's32[2]{0}', space=sflag, size = 0x8, scoped, tag = 'scoped memory for unet_up_forward.3']
    %7 = vsyncpa [#allocation3], 0
    %s8 = scalar_lea.sflag [#allocation3], 1
    %9 = vsyncpa %s8, 0
    loop: start=0, step=1, limit=4
    $region2: #{unet_up_forward.3} parent=1 // loop_pre_header
      _
    $region3: #{unet_up_forward.3} parent=1 // loop_header
      %s11 = sphi 0, %s15
      %p12 = scmp.ge.s32.totalorder %s11, 4
      %s21 = sphi 0, %s23
      %s24 = sphi 0, %s21
      %s25 = sphi 0, %s24
      %s41 = sphi 0, %s25
      %s47 = sphi 0, %s49
      %s50 = sphi 0, %s47
      %s51 = sphi 0, %s50
      %s67 = sphi 0, %s51
      %s73 = sphi 0, %s75
      %s76 = sphi 0, %s73
      %s77 = sphi 0, %s76
      %s93 = sphi 0, %s77
    $region4: #{unet_up_forward.3} parent=1 // loop_header_branch
      %14 = sbr.rel (%p12) target = $region8
    $region5: #{unet_up_forward.3} parent=1 // loop_body
      %s16 = ssub.s32 %s11, 1
      %s17 = ssub.s32 %s11, 2
      %s18 = sadd.s32 %s11, 1
      %s19 = ssub.s32 %s11, %s18
      %p20 = scmp.eq.s32.totalorder %s19, 0
      %s22 = sadd.s32 %s21, 1
      %s23 = scalar_select %p20, %s21, %s22
      %p26 = pneg %p20
      %p27 = scmp.eq.s32.totalorder %s11, 1
      %p28 = por %p26, %p27
      %p29 = scmp.ne.s32.totalorder %s21, %s24
      %p30 = scmp.eq.s32.totalorder %s11, 0
      %p31 = por %p29, %p30
      %p32 = scmp.ne.s32.totalorder %s21, %s24
      %p33 = scmp.eq.s32.totalorder %s16, 1
      %p34 = por %p32, %p33
      %p35 = scmp.ne.s32.totalorder %s24, %s25
      %p36 = scmp.eq.s32.totalorder %s16, 0
      %p37 = por %p35, %p36
      %p38 = scmp.ne.s32.totalorder %s24, %s25
      %p39 = scmp.eq.s32.totalorder %s17, 1
      %p40 = por %p38, %p39
      %p42 = scmp.ne.s32.totalorder %s25, %s41
      %p43 = scmp.eq.s32.totalorder %s17, 0
      %p44 = por %p42, %p43
      %s45 = ssub.s32 %s11, %s18
      %p46 = scmp.eq.s32.totalorder %s45, 0
      %s48 = sadd.s32 %s47, 1
      %s49 = scalar_select %p46, %s47, %s48
      %p52 = pneg %p46
      %p53 = scmp.eq.s32.totalorder %s11, 1
      %p54 = por %p52, %p53
      %p55 = scmp.ne.s32.totalorder %s47, %s50
      %p56 = scmp.eq.s32.totalorder %s11, 0
      %p57 = por %p55, %p56
      %p58 = scmp.ne.s32.totalorder %s47, %s50
      %p59 = scmp.eq.s32.totalorder %s16, 1
      %p60 = por %p58, %p59
      %p61 = scmp.ne.s32.totalorder %s50, %s51
      %p62 = scmp.eq.s32.totalorder %s16, 0
      %p63 = por %p61, %p62
      %p64 = scmp.ne.s32.totalorder %s50, %s51
      %p65 = scmp.eq.s32.totalorder %s17, 1
      %p66 = por %p64, %p65
      %p68 = scmp.ne.s32.totalorder %s51, %s67
      %p69 = scmp.eq.s32.totalorder %s17, 0
      %p70 = por %p68, %p69
      %s71 = ssub.s32 %s11, %s18
      %p72 = scmp.eq.s32.totalorder %s71, 0
      %s74 = sadd.s32 %s73, 1
      %s75 = scalar_select %p72, %s73, %s74
      %p78 = pneg %p72
      %p79 = scmp.eq.s32.totalorder %s11, 1
      %p80 = por %p78, %p79
      %p81 = scmp.ne.s32.totalorder %s73, %s76
      %p82 = scmp.eq.s32.totalorder %s11, 0
      %p83 = por %p81, %p82
      %p84 = scmp.ne.s32.totalorder %s73, %s76
      %p85 = scmp.eq.s32.totalorder %s16, 1
      %p86 = por %p84, %p85
      %p87 = scmp.ne.s32.totalorder %s76, %s77
      %p88 = scmp.eq.s32.totalorder %s16, 0
      %p89 = por %p87, %p88
      %p90 = scmp.ne.s32.totalorder %s76, %s77
      %p91 = scmp.eq.s32.totalorder %s17, 1
      %p92 = por %p90, %p91
      %p94 = scmp.ne.s32.totalorder %s77, %s93
      %p95 = scmp.eq.s32.totalorder %s17, 0
      %p96 = por %p94, %p95
      %p97 = scmp.le.s32.totalorder 1, %s11
      %p98 = scmp.lt.s32.totalorder %s11, 3
      %p99 = pnand %p97, %p98
      %p100 = pneg %p99
      // Predicated region
      $region9: #{unet_up_forward.3} parent=5 // pred_check
        _
      $region10: #{unet_up_forward.3} parent=5 // pred_check_branch
        %102 = sbr.rel (%p99) target = $region12
      $region11: #{unet_up_forward.3} parent=5 // pred_region
        %s103 = ssub.s32 %s11, 1
      $region12: #{unet_up_forward.3} parent=5 // pred_fallthru
        _
      %p104 = scmp.lt.s32.totalorder %s11, 2
      // Predicated region
      $region13: #{unet_up_forward.3} parent=5 // pred_check
        %p105 = pneg %p104
      $region14: #{unet_up_forward.3} parent=5 // pred_check_branch
        %107 = sbr.rel (%p105) target = $region16
      $region15: #{unet_up_forward.3} parent=5 // pred_region
        // Predicated region
        $region17: #{unet_up_forward.3} parent=15 // pred_check
          %p108 = pneg %p31
        $region18: #{unet_up_forward.3} parent=15 // pred_check_branch
          %110 = sbr.rel (%p108) target = $region20
        $region19: #{unet_up_forward.3} parent=15 // pred_region
          %p111 = scmp.lt.s32.totalorder %s11, 1
          %s112 = scalar_select %p111, %s11, 1
          %s113 = smul.addr %s112, 32
          %s114 = smul.addr %s113, 8
          %s115 = scalar_lea.vmem %s0, %s114
        $region20: #{unet_up_forward.3} parent=15 // pred_fallthru
          _
        // Predicated region
        $region21: #{unet_up_forward.3} parent=15 // pred_check
          %p116 = pneg %p57
        $region22: #{unet_up_forward.3} parent=15 // pred_check_branch
          %118 = sbr.rel (%p116) target = $region24
        $region23: #{unet_up_forward.3} parent=15 // pred_region
          %p119 = scmp.lt.s32.totalorder %s11, 1
          %s120 = scalar_select %p119, %s11, 1
          %s121 = smul.addr %s120, 32
          %s122 = smul.addr %s121, 8
          %s123 = scalar_lea.vmem %s1, %s122
        $region24: #{unet_up_forward.3} parent=15 // pred_fallthru
          _
      $region16: #{unet_up_forward.3} parent=5 // pred_fallthru
        _
      %p124 = scmp.le.s32.totalorder 1, %s11
      %p125 = scmp.lt.s32.totalorder %s11, 3
      %p126 = pnand %p124, %p125
      %p127 = pneg %p126
      // Predicated region
      $region25: #{unet_up_forward.3} parent=5 // pred_check
        _
      $region26: #{unet_up_forward.3} parent=5 // pred_check_branch
        %129 = sbr.rel (%p126) target = $region28
      $region27: #{unet_up_forward.3} parent=5 // pred_region
        %s130 = ssub.s32 %s11, 1
        %p131 = scmp.lt.s32.totalorder %s16, 1
        %s132 = scalar_select %p131, %s16, 1
        %s133 = smul.addr %s132, 32
        %s134 = smul.addr %s133, 8
        %s135 = scalar_lea.vmem %s0, %s134
        %p136 = pneg %p37
        %p137 = pneg %p34
        %p138 = scmp.lt.s32.totalorder %s16, 1
        %s139 = scalar_select %p138, %s16, 1
        %s140 = smul.addr %s139, 32
        %s141 = smul.addr %s140, 8
        %s142 = scalar_lea.vmem %s1, %s141
        %p143 = pneg %p63
        %p144 = pneg %p60
        %p145 = pneg %p89
        %p146 = pneg %p86
        %s147 = sand.u32 %s76, 1
        %s148 = scalar_lea.sflag [#allocation3], %s147
        %s149 = sand.u32 %s76, 1
        %s150 = smul.addr %s149, 512
        %s151 = scalar_lea.vmem [#allocation2], %s150
        %p152 = scmp.lt.s32.totalorder %s16, 1
        %s153 = scalar_select %p152, %s16, 1
        %s154 = smul.addr %s153, 32
        %s155 = smul.addr %s154, 8
        %s156 = scalar_lea.vmem %s0, %s155
        %p157 = scmp.lt.s32.totalorder %s16, 1
        %s158 = scalar_select %p157, %s16, 1
        %s159 = smul.addr %s158, 32
        %s160 = smul.addr %s159, 8
        %s161 = scalar_lea.vmem %s1, %s160
        %v162 = vld [vmem:[%s156] sm:$0xff]
        %v163 = vld [vmem:[%s156 + $0x8] sm:$0xff]
        %v164 = vld [vmem:[%s156 + $0x10] sm:$0xff]
        %v165 = vld [vmem:[%s156 + $0x18] sm:$0xff]
        %v166 = vld [vmem:[%s156 + $0x20] sm:$0xff]
        %v167 = vld [vmem:[%s156 + $0x28] sm:$0xff]
        %v168 = vld [vmem:[%s156 + $0x30] sm:$0xff]
        %v169 = vld [vmem:[%s156 + $0x38] sm:$0xff]
        %v170 = vld [vmem:[%s156 + $0x40] sm:$0xff]
        %v171 = vld [vmem:[%s156 + $0x48] sm:$0xff]
        %v172 = vld [vmem:[%s156 + $0x50] sm:$0xff]
        %v173 = vld [vmem:[%s156 + $0x58] sm:$0xff]
        %v174 = vld [vmem:[%s156 + $0x60] sm:$0xff]
        %v175 = vld [vmem:[%s156 + $0x68] sm:$0xff]
        %v176 = vld [vmem:[%s156 + $0x70] sm:$0xff]
        %v177 = vld [vmem:[%s156 + $0x78] sm:$0xff]
        %v178 = vld [vmem:[%s156 + $0x80] sm:$0xff]
        %v179 = vld [vmem:[%s156 + $0x88] sm:$0xff]
        %v180 = vld [vmem:[%s156 + $0x90] sm:$0xff]
        %v181 = vld [vmem:[%s156 + $0x98] sm:$0xff]
        %v182 = vld [vmem:[%s156 + $0xa0] sm:$0xff]
        %v183 = vld [vmem:[%s156 + $0xa8] sm:$0xff]
        %v184 = vld [vmem:[%s156 + $0xb0] sm:$0xff]
        %v185 = vld [vmem:[%s156 + $0xb8] sm:$0xff]
        %v186 = vld [vmem:[%s156 + $0xc0] sm:$0xff]
        %v187 = vld [vmem:[%s156 + $0xc8] sm:$0xff]
        %v188 = vld [vmem:[%s156 + $0xd0] sm:$0xff]
        %v189 = vld [vmem:[%s156 + $0xd8] sm:$0xff]
        %v190 = vld [vmem:[%s156 + $0xe0] sm:$0xff]
        %v191 = vld [vmem:[%s156 + $0xe8] sm:$0xff]
        %v192 = vld [vmem:[%s156 + $0xf0] sm:$0xff]
        %v193 = vld [vmem:[%s156 + $0xf8] sm:$0xff]
        %v194 = vadd.f32 %v162, %v163
        %v195 = vadd.f32 %v194, %v164
        %v196 = vadd.f32 %v195, %v165
        %v197 = vadd.f32 %v196, %v166
        %v198 = vadd.f32 %v197, %v167
        %v199 = vadd.f32 %v198, %v168
        %v200 = vadd.f32 %v199, %v169
        %v201 = vadd.f32 %v200, %v170
        %v202 = vadd.f32 %v201, %v171
        %v203 = vadd.f32 %v202, %v172
        %v204 = vadd.f32 %v203, %v173
        %v205 = vadd.f32 %v204, %v174
        %v206 = vadd.f32 %v205, %v175
        %v207 = vadd.f32 %v206, %v176
        %v208 = vadd.f32 %v207, %v177
        %v209 = vadd.f32 %v208, %v178
        %v210 = vadd.f32 %v209, %v179
        %v211 = vadd.f32 %v210, %v180
        %v212 = vadd.f32 %v211, %v181
        %v213 = vadd.f32 %v212, %v182
        %v214 = vadd.f32 %v213, %v183
        %v215 = vadd.f32 %v214, %v184
        %v216 = vadd.f32 %v215, %v185
        %v217 = vadd.f32 %v216, %v186
        %v218 = vadd.f32 %v217, %v187
        %v219 = vadd.f32 %v218, %v188
        %v220 = vadd.f32 %v219, %v189
        %v221 = vadd.f32 %v220, %v190
        %v222 = vadd.f32 %v221, %v191
        %v223 = vadd.f32 %v222, %v192
        %v224 = vadd.f32 %v223, %v193
        %v225 = vrot.slane %v224, 4
        %v226 = vadd.f32 %v224, %v225
        %v227 = vrot.slane %v226, 2
        %v228 = vadd.f32 %v226, %v227
        %v229 = vrot.slane %v228, 1
        %v230 = vadd.f32 %v228, %v229
        %v231 = vrcp.pop 256.0
        %v232 = vmul.f32 %v230, %v231
        %v233 = vsub.f32 %v162, %v232
        %v234 = vsub.f32 %v163, %v232
        %v235 = vsub.f32 %v164, %v232
        %v236 = vsub.f32 %v165, %v232
        %v237 = vsub.f32 %v166, %v232
        %v238 = vsub.f32 %v167, %v232
        %v239 = vsub.f32 %v168, %v232
        %v240 = vsub.f32 %v169, %v232
        %v241 = vsub.f32 %v170, %v232
        %v242 = vsub.f32 %v171, %v232
        %v243 = vsub.f32 %v172, %v232
        %v244 = vsub.f32 %v173, %v232
        %v245 = vsub.f32 %v174, %v232
        %v246 = vsub.f32 %v175, %v232
        %v247 = vsub.f32 %v176, %v232
        %v248 = vsub.f32 %v177, %v232
        %v249 = vsub.f32 %v178, %v232
        %v250 = vsub.f32 %v179, %v232
        %v251 = vsub.f32 %v180, %v232
        %v252 = vsub.f32 %v181, %v232
        %v253 = vsub.f32 %v182, %v232
        %v254 = vsub.f32 %v183, %v232
        %v255 = vsub.f32 %v184, %v232
        %v256 = vsub.f32 %v185, %v232
        %v257 = vsub.f32 %v186, %v232
        %v258 = vsub.f32 %v187, %v232
        %v259 = vsub.f32 %v188, %v232
        %v260 = vsub.f32 %v189, %v232
        %v261 = vsub.f32 %v190, %v232
        %v262 = vsub.f32 %v191, %v232
        %v263 = vsub.f32 %v192, %v232
        %v264 = vsub.f32 %v193, %v232
        %v265 = vmul.f32 %v233, %v233
        %v266 = vmul.f32 %v234, %v234
        %v267 = vmul.f32 %v235, %v235
        %v268 = vmul.f32 %v236, %v236
        %v269 = vmul.f32 %v237, %v237
        %v270 = vmul.f32 %v238, %v238
        %v271 = vmul.f32 %v239, %v239
        %v272 = vmul.f32 %v240, %v240
        %v273 = vmul.f32 %v241, %v241
        %v274 = vmul.f32 %v242, %v242
        %v275 = vmul.f32 %v243, %v243
        %v276 = vmul.f32 %v244, %v244
        %v277 = vmul.f32 %v245, %v245
        %v278 = vmul.f32 %v246, %v246
        %v279 = vmul.f32 %v247, %v247
        %v280 = vmul.f32 %v248, %v248
        %v281 = vmul.f32 %v249, %v249
        %v282 = vmul.f32 %v250, %v250
        %v283 = vmul.f32 %v251, %v251
        %v284 = vmul.f32 %v252, %v252
        %v285 = vmul.f32 %v253, %v253
        %v286 = vmul.f32 %v254, %v254
        %v287 = vmul.f32 %v255, %v255
        %v288 = vmul.f32 %v256, %v256
        %v289 = vmul.f32 %v257, %v257
        %v290 = vmul.f32 %v258, %v258
        %v291 = vmul.f32 %v259, %v259
        %v292 = vmul.f32 %v260, %v260
        %v293 = vmul.f32 %v261, %v261
        %v294 = vmul.f32 %v262, %v262
        %v295 = vmul.f32 %v263, %v263
        %v296 = vmul.f32 %v264, %v264
        %v297 = vadd.f32 %v265, %v266
        %v298 = vadd.f32 %v297, %v267
        %v299 = vadd.f32 %v298, %v268
        %v300 = vadd.f32 %v299, %v269
        %v301 = vadd.f32 %v300, %v270
        %v302 = vadd.f32 %v301, %v271
        %v303 = vadd.f32 %v302, %v272
        %v304 = vadd.f32 %v303, %v273
        %v305 = vadd.f32 %v304, %v274
        %v306 = vadd.f32 %v305, %v275
        %v307 = vadd.f32 %v306, %v276
        %v308 = vadd.f32 %v307, %v277
        %v309 = vadd.f32 %v308, %v278
        %v310 = vadd.f32 %v309, %v279
        %v311 = vadd.f32 %v310, %v280
        %v312 = vadd.f32 %v311, %v281
        %v313 = vadd.f32 %v312, %v282
        %v314 = vadd.f32 %v313, %v283
        %v315 = vadd.f32 %v314, %v284
        %v316 = vadd.f32 %v315, %v285
        %v317 = vadd.f32 %v316, %v286
        %v318 = vadd.f32 %v317, %v287
        %v319 = vadd.f32 %v318, %v288
        %v320 = vadd.f32 %v319, %v289
        %v321 = vadd.f32 %v320, %v290
        %v322 = vadd.f32 %v321, %v291
        %v323 = vadd.f32 %v322, %v292
        %v324 = vadd.f32 %v323, %v293
        %v325 = vadd.f32 %v324, %v294
        %v326 = vadd.f32 %v325, %v295
        %v327 = vadd.f32 %v326, %v296
        %v328 = vrot.slane %v327, 4
        %v329 = vadd.f32 %v327, %v328
        %v330 = vrot.slane %v329, 2
        %v331 = vadd.f32 %v329, %v330
        %v332 = vrot.slane %v331, 1
        %v333 = vadd.f32 %v331, %v332
        %v334 = vmul.f32 %v333, %v231
        %v335 = vadd.f32 %v334, 1e-05
        %v336 = vrsqrt.pop %v335
        %v337 = vmul.f32 %v233, %v336
        %v338 = vmul.f32 %v234, %v336
        %v339 = vmul.f32 %v235, %v336
        %v340 = vmul.f32 %v236, %v336
        %v341 = vmul.f32 %v237, %v336
        %v342 = vmul.f32 %v238, %v336
        %v343 = vmul.f32 %v239, %v336
        %v344 = vmul.f32 %v240, %v336
        %v345 = vmul.f32 %v241, %v336
        %v346 = vmul.f32 %v242, %v336
        %v347 = vmul.f32 %v243, %v336
        %v348 = vmul.f32 %v244, %v336
        %v349 = vmul.f32 %v245, %v336
        %v350 = vmul.f32 %v246, %v336
        %v351 = vmul.f32 %v247, %v336
        %v352 = vmul.f32 %v248, %v336
        %v353 = vmul.f32 %v249, %v336
        %v354 = vmul.f32 %v250, %v336
        %v355 = vmul.f32 %v251, %v336
        %v356 = vmul.f32 %v252, %v336
        %v357 = vmul.f32 %v253, %v336
        %v358 = vmul.f32 %v254, %v336
        %v359 = vmul.f32 %v255, %v336
        %v360 = vmul.f32 %v256, %v336
        %v361 = vmul.f32 %v257, %v336
        %v362 = vmul.f32 %v258, %v336
        %v363 = vmul.f32 %v259, %v336
        %v364 = vmul.f32 %v260, %v336
        %v365 = vmul.f32 %v261, %v336
        %v366 = vmul.f32 %v262, %v336
        %v367 = vmul.f32 %v263, %v336
        %v368 = vmul.f32 %v264, %v336
        %v369 = vmax.f32 %v337, 0.0
        %v370 = vmax.f32 %v338, 0.0
        %v371 = vmax.f32 %v339, 0.0
        %v372 = vmax.f32 %v340, 0.0
        %v373 = vmax.f32 %v341, 0.0
        %v374 = vmax.f32 %v342, 0.0
        %v375 = vmax.f32 %v343, 0.0
        %v376 = vmax.f32 %v344, 0.0
        %v377 = vmax.f32 %v345, 0.0
        %v378 = vmax.f32 %v346, 0.0
        %v379 = vmax.f32 %v347, 0.0
        %v380 = vmax.f32 %v348, 0.0
        %v381 = vmax.f32 %v349, 0.0
        %v382 = vmax.f32 %v350, 0.0
        %v383 = vmax.f32 %v351, 0.0
        %v384 = vmax.f32 %v352, 0.0
        %v385 = vmax.f32 %v353, 0.0
        %v386 = vmax.f32 %v354, 0.0
        %v387 = vmax.f32 %v355, 0.0
        %v388 = vmax.f32 %v356, 0.0
        %v389 = vmax.f32 %v357, 0.0
        %v390 = vmax.f32 %v358, 0.0
        %v391 = vmax.f32 %v359, 0.0
        %v392 = vmax.f32 %v360, 0.0
        %v393 = vmax.f32 %v361, 0.0
        %v394 = vmax.f32 %v362, 0.0
        %v395 = vmax.f32 %v363, 0.0
        %v396 = vmax.f32 %v364, 0.0
        %v397 = vmax.f32 %v365, 0.0
        %v398 = vmax.f32 %v366, 0.0
        %v399 = vmax.f32 %v367, 0.0
        %v400 = vmax.f32 %v368, 0.0
        %401 = vst [vmem:[%s151] sm:$0xff] %v369
        %402 = vst [vmem:[%s151 + $0x10] sm:$0xff] %v370
        %403 = vst [vmem:[%s151 + $0x20] sm:$0xff] %v371
        %404 = vst [vmem:[%s151 + $0x30] sm:$0xff] %v372
        %405 = vst [vmem:[%s151 + $0x40] sm:$0xff] %v373
        %406 = vst [vmem:[%s151 + $0x50] sm:$0xff] %v374
        %407 = vst [vmem:[%s151 + $0x60] sm:$0xff] %v375
        %408 = vst [vmem:[%s151 + $0x70] sm:$0xff] %v376
        %409 = vst [vmem:[%s151 + $0x80] sm:$0xff] %v377
        %410 = vst [vmem:[%s151 + $0x90] sm:$0xff] %v378
        %411 = vst [vmem:[%s151 + $0xa0] sm:$0xff] %v379
        %412 = vst [vmem:[%s151 + $0xb0] sm:$0xff] %v380
        %413 = vst [vmem:[%s151 + $0xc0] sm:$0xff] %v381
        %414 = vst [vmem:[%s151 + $0xd0] sm:$0xff] %v382
        %415 = vst [vmem:[%s151 + $0xe0] sm:$0xff] %v383
        %416 = vst [vmem:[%s151 + $0xf0] sm:$0xff] %v384
        %417 = vst [vmem:[%s151 + $0x100] sm:$0xff] %v385
        %418 = vst [vmem:[%s151 + $0x110] sm:$0xff] %v386
        %419 = vst [vmem:[%s151 + $0x120] sm:$0xff] %v387
        %420 = vst [vmem:[%s151 + $0x130] sm:$0xff] %v388
        %421 = vst [vmem:[%s151 + $0x140] sm:$0xff] %v389
        %422 = vst [vmem:[%s151 + $0x150] sm:$0xff] %v390
        %423 = vst [vmem:[%s151 + $0x160] sm:$0xff] %v391
        %424 = vst [vmem:[%s151 + $0x170] sm:$0xff] %v392
        %425 = vst [vmem:[%s151 + $0x180] sm:$0xff] %v393
        %426 = vst [vmem:[%s151 + $0x190] sm:$0xff] %v394
        %427 = vst [vmem:[%s151 + $0x1a0] sm:$0xff] %v395
        %428 = vst [vmem:[%s151 + $0x1b0] sm:$0xff] %v396
        %429 = vst [vmem:[%s151 + $0x1c0] sm:$0xff] %v397
        %430 = vst [vmem:[%s151 + $0x1d0] sm:$0xff] %v398
        %431 = vst [vmem:[%s151 + $0x1e0] sm:$0xff] %v399
        %432 = vst [vmem:[%s151 + $0x1f0] sm:$0xff] %v400
        %v433 = vld [vmem:[%s161] sm:$0xff]
        %v434 = vld [vmem:[%s161 + $0x8] sm:$0xff]
        %v435 = vld [vmem:[%s161 + $0x10] sm:$0xff]
        %v436 = vld [vmem:[%s161 + $0x18] sm:$0xff]
        %v437 = vld [vmem:[%s161 + $0x20] sm:$0xff]
        %v438 = vld [vmem:[%s161 + $0x28] sm:$0xff]
        %v439 = vld [vmem:[%s161 + $0x30] sm:$0xff]
        %v440 = vld [vmem:[%s161 + $0x38] sm:$0xff]
        %v441 = vld [vmem:[%s161 + $0x40] sm:$0xff]
        %v442 = vld [vmem:[%s161 + $0x48] sm:$0xff]
        %v443 = vld [vmem:[%s161 + $0x50] sm:$0xff]
        %v444 = vld [vmem:[%s161 + $0x58] sm:$0xff]
        %v445 = vld [vmem:[%s161 + $0x60] sm:$0xff]
        %v446 = vld [vmem:[%s161 + $0x68] sm:$0xff]
        %v447 = vld [vmem:[%s161 + $0x70] sm:$0xff]
        %v448 = vld [vmem:[%s161 + $0x78] sm:$0xff]
        %v449 = vld [vmem:[%s161 + $0x80] sm:$0xff]
        %v450 = vld [vmem:[%s161 + $0x88] sm:$0xff]
        %v451 = vld [vmem:[%s161 + $0x90] sm:$0xff]
        %v452 = vld [vmem:[%s161 + $0x98] sm:$0xff]
        %v453 = vld [vmem:[%s161 + $0xa0] sm:$0xff]
        %v454 = vld [vmem:[%s161 + $0xa8] sm:$0xff]
        %v455 = vld [vmem:[%s161 + $0xb0] sm:$0xff]
        %v456 = vld [vmem:[%s161 + $0xb8] sm:$0xff]
        %v457 = vld [vmem:[%s161 + $0xc0] sm:$0xff]
        %v458 = vld [vmem:[%s161 + $0xc8] sm:$0xff]
        %v459 = vld [vmem:[%s161 + $0xd0] sm:$0xff]
        %v460 = vld [vmem:[%s161 + $0xd8] sm:$0xff]
        %v461 = vld [vmem:[%s161 + $0xe0] sm:$0xff]
        %v462 = vld [vmem:[%s161 + $0xe8] sm:$0xff]
        %v463 = vld [vmem:[%s161 + $0xf0] sm:$0xff]
        %v464 = vld [vmem:[%s161 + $0xf8] sm:$0xff]
        %465 = vst [vmem:[%s151 + $0x8] sm:$0xff] %v433
        %466 = vst [vmem:[%s151 + $0x18] sm:$0xff] %v434
        %467 = vst [vmem:[%s151 + $0x28] sm:$0xff] %v435
        %468 = vst [vmem:[%s151 + $0x38] sm:$0xff] %v436
        %469 = vst [vmem:[%s151 + $0x48] sm:$0xff] %v437
        %470 = vst [vmem:[%s151 + $0x58] sm:$0xff] %v438
        %471 = vst [vmem:[%s151 + $0x68] sm:$0xff] %v439
        %472 = vst [vmem:[%s151 + $0x78] sm:$0xff] %v440
        %473 = vst [vmem:[%s151 + $0x88] sm:$0xff] %v441
        %474 = vst [vmem:[%s151 + $0x98] sm:$0xff] %v442
        %475 = vst [vmem:[%s151 + $0xa8] sm:$0xff] %v443
        %476 = vst [vmem:[%s151 + $0xb8] sm:$0xff] %v444
        %477 = vst [vmem:[%s151 + $0xc8] sm:$0xff] %v445
        %478 = vst [vmem:[%s151 + $0xd8] sm:$0xff] %v446
        %479 = vst [vmem:[%s151 + $0xe8] sm:$0xff] %v447
        %480 = vst [vmem:[%s151 + $0xf8] sm:$0xff] %v448
        %481 = vst [vmem:[%s151 + $0x108] sm:$0xff] %v449
        %482 = vst [vmem:[%s151 + $0x118] sm:$0xff] %v450
        %483 = vst [vmem:[%s151 + $0x128] sm:$0xff] %v451
        %484 = vst [vmem:[%s151 + $0x138] sm:$0xff] %v452
        %485 = vst [vmem:[%s151 + $0x148] sm:$0xff] %v453
        %486 = vst [vmem:[%s151 + $0x158] sm:$0xff] %v454
        %487 = vst [vmem:[%s151 + $0x168] sm:$0xff] %v455
        %488 = vst [vmem:[%s151 + $0x178] sm:$0xff] %v456
        %489 = vst [vmem:[%s151 + $0x188] sm:$0xff] %v457
        %490 = vst [vmem:[%s151 + $0x198] sm:$0xff] %v458
        %491 = vst [vmem:[%s151 + $0x1a8] sm:$0xff] %v459
        %492 = vst [vmem:[%s151 + $0x1b8] sm:$0xff] %v460
        %493 = vst [vmem:[%s151 + $0x1c8] sm:$0xff] %v461
        %494 = vst [vmem:[%s151 + $0x1d8] sm:$0xff] %v462
        %495 = vst [vmem:[%s151 + $0x1e8] sm:$0xff] %v463
        %496 = vst [vmem:[%s151 + $0x1f8] sm:$0xff] %v464
        %s497 = sand.u32 %s76, 1
        %s498 = scalar_lea.sflag [#allocation3], %s497
        %s499 = sand.u32 %s76, 1
        %s500 = smul.addr %s499, 512
        %s501 = scalar_lea.vmem [#allocation2], %s500
        // Predicated region
        $region29: #{unet_up_forward.3} parent=27 // pred_check
          %p502 = pneg %p86
        $region30: #{unet_up_forward.3} parent=27 // pred_check_branch
          %504 = sbr.rel (%p502) target = $region32
        $region31: #{unet_up_forward.3} parent=27 // pred_region
          %s506 = ssub.s32 8192, 8192
          %507 = vsyncadd %s498, %s506
          %s508 = smul.addr %s16, 64
          %s509 = smul.addr %s508, 128
          %s510 = scalar_lea.hbm %s2, %s509
          %s511 = sshll.u32 %s501, 4
          %s512 = int_to_ptr.vmem [resolvable:$true] %s511
          %517 = dma.vmem_to_hbm [thread:$0]  %s512, 8192, %s510, %s498, 256, 256, 16
        $region32: #{unet_up_forward.3} parent=27 // pred_fallthru
          _
      $region28: #{unet_up_forward.3} parent=5 // pred_fallthru
        _
      %p518 = scmp.le.s32.totalorder 2, %s11
      // Predicated region
      $region33: #{unet_up_forward.3} parent=5 // pred_check
        %p519 = pneg %p518
      $region34: #{unet_up_forward.3} parent=5 // pred_check_branch
        %521 = sbr.rel (%p519) target = $region36
      $region35: #{unet_up_forward.3} parent=5 // pred_region
        %s522 = ssub.s32 %s11, 2
        // Predicated region
        $region37: #{unet_up_forward.3} parent=35 // pred_check
          %p523 = pneg %p92
        $region38: #{unet_up_forward.3} parent=35 // pred_check_branch
          %525 = sbr.rel (%p523) target = $region40
        $region39: #{unet_up_forward.3} parent=35 // pred_region
          %s526 = sand.u32 %s77, 1
          %s527 = scalar_lea.sflag [#allocation3], %s526
          %s528 = sand.u32 %s77, 1
          %s529 = smul.addr %s528, 512
          %s530 = scalar_lea.vmem [#allocation2], %s529
          %531 = dma.done %s527, 8192
        $region40: #{unet_up_forward.3} parent=35 // pred_fallthru
          _
      $region36: #{unet_up_forward.3} parent=5 // pred_fallthru
        _
    $region6: #{unet_up_forward.3} parent=1 // loop_footer
      %s15 = sadd.s32 1, %s11
    $region7: #{unet_up_forward.3} parent=1 // loop_footer_branch
      %10 = sbr.rel target = $region3
    $region8: #{unet_up_forward.3} parent=1 // loop_exit
      _
    %532 = vsyncpa [#allocation3], 1
    %s533 = scalar_lea.sflag [#allocation3], 1
    %534 = vsyncpa %s533, 1

// kernel: unet_up_forward.2
$region0: #{unet_up_forward.2}
  #allocation0 [shape = 'u32[]', space=smem, size = 0x4, offset = 0x4, fixed_abs, tag = 'smem constant byte address 0x4 - core index']
  #allocation1 [shape = 'u32[144,128]{1,0:T(1,128)}', space=vmem, size = 0x12000, scoped, tag = 'internal scratch']
  #allocation2 [shape = 'f32[128,128]{1,0:T(8,128)}', space=vmem, size = 0x10000, scoped, tag = 'scratch operand']
  %s0 = inlined_call_operand.vmem [shape: bf16[4,128,1024], index: 0, kind: input, shape index: {}]
  %s1 = inlined_call_operand.vmem [shape: bf16[4,1024,128], index: 1, kind: input, shape index: {}]
  %s2 = inlined_call_operand.vmem [shape: f32[1,128], index: 2, kind: input, shape index: {}]
  %s3 = inlined_call_operand.vmem [shape: f32[4,128,128], index: 3, kind: output, shape index: {}]
  %s4 = sld [smem:[#allocation0]]
  $region53: #{unet_up_forward.2} parent=0
    _
  %s6 = ssub.s32 1, %s4
  %s7 = scalar_select 0, %s6, %s4
  loop: start=0, step=1, limit=6
  $region2: #{unet_up_forward.2} parent=0 // loop_pre_header
    _
  $region3: #{unet_up_forward.2} parent=0 // loop_header
    %s9 = sphi 0, %s13
    %p10 = scmp.ge.s32.totalorder %s9, 6
    %s16 = sphi 0, %s42
    %s17 = sphi 0, %s38
    %s18 = sphi 0, %s34
    %s19 = sphi 0, %s30
    %s20 = sphi 0, %s16
    %s21 = sphi 0, %s17
    %s22 = sphi 0, %s18
    %s23 = sphi 0, %s19
    %s24 = sphi 0, %s20
    %s25 = sphi 0, %s21
    %s26 = sphi 0, %s22
    %s27 = sphi 0, %s23
    %s49 = sphi 0, %s51
    %s52 = sphi 0, %s49
    %s53 = sphi 0, %s52
    %s69 = sphi 0, %s53
    %s79 = sphi 0, %s81
    %s82 = sphi 0, %s79
    %s83 = sphi 0, %s82
    %s99 = sphi 0, %s83
    %s105 = sphi 0, %s107
    %s108 = sphi 0, %s105
    %s109 = sphi 0, %s108
    %s125 = sphi 0, %s109
    %s135 = sphi 0, %s137
    %s138 = sphi 0, %s135
    %s139 = sphi 0, %s138
    %s155 = sphi 0, %s139
  $region4: #{unet_up_forward.2} parent=0 // loop_header_branch
    %12 = sbr.rel (%p10) target = $region8
  $region5: #{unet_up_forward.2} parent=0 // loop_body
    %s14 = ssub.s32 %s9, 1
    %s15 = ssub.s32 %s9, 2
    %s28 = sadd.s32 1, %s19
    %p29 = scmp.ge.s32.totalorder %s28, 1
    %s30 = scalar_select %p29, 0, %s28
    %s31 = sadd.s32 1, %s18
    %s32 = scalar_select %p29, %s31, %s18
    %p33 = scmp.ge.s32.totalorder %s32, 1
    %s34 = scalar_select %p33, 0, %s32
    %s35 = sadd.s32 1, %s17
    %s36 = scalar_select %p33, %s35, %s17
    %p37 = scmp.ge.s32.totalorder %s36, 1
    %s38 = scalar_select %p37, 0, %s36
    %s39 = sadd.s32 1, %s16
    %s40 = scalar_select %p37, %s39, %s16
    %p41 = scmp.ge.s32.totalorder %s40, 4
    %s42 = scalar_select %p41, 0, %s40
    %s43 = ssub.s32 %s16, %s42
    %s44 = ssub.s32 %s17, %s38
    %s45 = sor.u32 %s43, %s44
    %s46 = ssub.s32 %s19, %s30
    %s47 = sor.u32 %s45, %s46
    %p48 = scmp.eq.s32.totalorder %s47, 0
    %s50 = sadd.s32 %s49, 1
    %s51 = scalar_select %p48, %s49, %s50
    %p54 = pneg %p48
    %p55 = scmp.eq.s32.totalorder %s9, 3
    %p56 = por %p54, %p55
    %p57 = scmp.ne.s32.totalorder %s49, %s52
    %p58 = scmp.eq.s32.totalorder %s9, 0
    %p59 = por %p57, %p58
    %p60 = scmp.ne.s32.totalorder %s49, %s52
    %p61 = scmp.eq.s32.totalorder %s14, 3
    %p62 = por %p60, %p61
    %p63 = scmp.ne.s32.totalorder %s52, %s53
    %p64 = scmp.eq.s32.totalorder %s14, 0
    %p65 = por %p63, %p64
    %p66 = scmp.ne.s32.totalorder %s52, %s53
    %p67 = scmp.eq.s32.totalorder %s15, 3
    %p68 = por %p66, %p67
    %p70 = scmp.ne.s32.totalorder %s53, %s69
    %p71 = scmp.eq.s32.totalorder %s15, 0
    %p72 = por %p70, %p71
    %s73 = ssub.s32 %s16, %s42
    %s74 = ssub.s32 %s19, %s30
    %s75 = sor.u32 %s73, %s74
    %s76 = ssub.s32 %s18, %s34
    %s77 = sor.u32 %s75, %s76
    %p78 = scmp.eq.s32.totalorder %s77, 0
    %s80 = sadd.s32 %s79, 1
    %s81 = scalar_select %p78, %s79, %s80
    %p84 = pneg %p78
    %p85 = scmp.eq.s32.totalorder %s9, 3
    %p86 = por %p84, %p85
    %p87 = scmp.ne.s32.totalorder %s79, %s82
    %p88 = scmp.eq.s32.totalorder %s9, 0
    %p89 = por %p87, %p88
    %p90 = scmp.ne.s32.totalorder %s79, %s82
    %p91 = scmp.eq.s32.totalorder %s14, 3
    %p92 = por %p90, %p91
    %p93 = scmp.ne.s32.totalorder %s82, %s83
    %p94 = scmp.eq.s32.totalorder %s14, 0
    %p95 = por %p93, %p94
    %p96 = scmp.ne.s32.totalorder %s82, %s83
    %p97 = scmp.eq.s32.totalorder %s15, 3
    %p98 = por %p96, %p97
    %p100 = scmp.ne.s32.totalorder %s83, %s99
    %p101 = scmp.eq.s32.totalorder %s15, 0
    %p102 = por %p100, %p101
    %s103 = ssub.s32 %s18, %s34
    %p104 = scmp.eq.s32.totalorder %s103, 0
    %s106 = sadd.s32 %s105, 1
    %s107 = scalar_select %p104, %s105, %s106
    %p110 = pneg %p104
    %p111 = scmp.eq.s32.totalorder %s9, 3
    %p112 = por %p110, %p111
    %p113 = scmp.ne.s32.totalorder %s105, %s108
    %p114 = scmp.eq.s32.totalorder %s9, 0
    %p115 = por %p113, %p114
    %p116 = scmp.ne.s32.totalorder %s105, %s108
    %p117 = scmp.eq.s32.totalorder %s14, 3
    %p118 = por %p116, %p117
    %p119 = scmp.ne.s32.totalorder %s108, %s109
    %p120 = scmp.eq.s32.totalorder %s14, 0
    %p121 = por %p119, %p120
    %p122 = scmp.ne.s32.totalorder %s108, %s109
    %p123 = scmp.eq.s32.totalorder %s15, 3
    %p124 = por %p122, %p123
    %p126 = scmp.ne.s32.totalorder %s109, %s125
    %p127 = scmp.eq.s32.totalorder %s15, 0
    %p128 = por %p126, %p127
    %s129 = ssub.s32 %s16, %s42
    %s130 = ssub.s32 %s17, %s38
    %s131 = sor.u32 %s129, %s130
    %s132 = ssub.s32 %s18, %s34
    %s133 = sor.u32 %s131, %s132
    %p134 = scmp.eq.s32.totalorder %s133, 0
    %s136 = sadd.s32 %s135, 1
    %s137 = scalar_select %p134, %s135, %s136
    %p140 = pneg %p134
    %p141 = scmp.eq.s32.totalorder %s9, 3
    %p142 = por %p140, %p141
    %p143 = scmp.ne.s32.totalorder %s135, %s138
    %p144 = scmp.eq.s32.totalorder %s9, 0
    %p145 = por %p143, %p144
    %p146 = scmp.ne.s32.totalorder %s135, %s138
    %p147 = scmp.eq.s32.totalorder %s14, 3
    %p148 = por %p146, %p147
    %p149 = scmp.ne.s32.totalorder %s138, %s139
    %p150 = scmp.eq.s32.totalorder %s14, 0
    %p151 = por %p149, %p150
    %p152 = scmp.ne.s32.totalorder %s138, %s139
    %p153 = scmp.eq.s32.totalorder %s15, 3
    %p154 = por %p152, %p153
    %p156 = scmp.ne.s32.totalorder %s139, %s155
    %p157 = scmp.eq.s32.totalorder %s15, 0
    %p158 = por %p156, %p157
    %p159 = scmp.le.s32.totalorder 1, %s9
    %p160 = scmp.lt.s32.totalorder %s9, 5
    %p161 = pnand %p159, %p160
    %p162 = pneg %p161
    // Predicated region
    $region9: #{unet_up_forward.2} parent=5 // pred_check
      _
    $region10: #{unet_up_forward.2} parent=5 // pred_check_branch
      %164 = sbr.rel (%p161) target = $region12
    $region11: #{unet_up_forward.2} parent=5 // pred_region
      %s165 = ssub.s32 %s9, 1
      // Predicated region
      $region13: #{unet_up_forward.2} parent=11 // pred_check
        %p166 = pneg %p121
      $region14: #{unet_up_forward.2} parent=11 // pred_check_branch
        %168 = sbr.rel (%p166) target = $region16
      $region15: #{unet_up_forward.2} parent=11 // pred_region
        %p169 = scmp.lt.s32.totalorder %s22, 0
        %s170 = scalar_select %p169, %s22, 0
        %s171 = scalar_lea.vmem %s2, %s170
      $region16: #{unet_up_forward.2} parent=11 // pred_fallthru
        _
    $region12: #{unet_up_forward.2} parent=5 // pred_fallthru
      _
    %p172 = scmp.lt.s32.totalorder %s9, 4
    // Predicated region
    $region17: #{unet_up_forward.2} parent=5 // pred_check
      %p173 = pneg %p172
    $region18: #{unet_up_forward.2} parent=5 // pred_check_branch
      %175 = sbr.rel (%p173) target = $region20
    $region19: #{unet_up_forward.2} parent=5 // pred_region
      // Predicated region
      $region21: #{unet_up_forward.2} parent=19 // pred_check
        %p176 = pneg %p59
      $region22: #{unet_up_forward.2} parent=19 // pred_check_branch
        %178 = sbr.rel (%p176) target = $region24
      $region23: #{unet_up_forward.2} parent=19 // pred_region
        %s179 = smul.u32 16, %s17
        %s180 = smul.u32 8, %s19
        %p181 = scmp.lt.s32.totalorder %s16, 3
        %s182 = scalar_select %p181, %s16, 3
        %p183 = scmp.lt.s32.totalorder %s179, 15
        %s184 = scalar_select %p183, %s179, 15
        %p185 = scmp.lt.s32.totalorder %s180, 7
        %s186 = scalar_select %p185, %s180, 7
        %s187 = smul.addr %s184, 8
        %s188 = sadd.s32 %s186, %s187
        %s189 = smul.addr %s182, 128
        %s190 = sadd.s32 %s188, %s189
        %s191 = smul.addr %s190, 4
        %s192 = scalar_lea.vmem %s0, %s191
        %s193 = smul.u32 16, %s17
        %s194 = smul.u32 8, %s19
      $region24: #{unet_up_forward.2} parent=19 // pred_fallthru
        _
      // Predicated region
      $region25: #{unet_up_forward.2} parent=19 // pred_check
        %p195 = pneg %p89
      $region26: #{unet_up_forward.2} parent=19 // pred_check_branch
        %197 = sbr.rel (%p195) target = $region28
      $region27: #{unet_up_forward.2} parent=19 // pred_region
        %s198 = smul.u32 128, %s19
        %p199 = scmp.lt.s32.totalorder %s16, 3
        %s200 = scalar_select %p199, %s16, 3
        %p201 = scmp.lt.s32.totalorder %s198, 127
        %s202 = scalar_select %p201, %s198, 127
        %p203 = scmp.lt.s32.totalorder %s18, 0
        %s204 = scalar_select %p203, %s18, 0
        %s205 = sadd.s32 %s204, %s202
        %s206 = smul.addr %s200, 128
        %s207 = sadd.s32 %s205, %s206
        %s208 = smul.addr %s207, 4
        %s209 = scalar_lea.vmem %s1, %s208
        %s210 = smul.u32 128, %s19
      $region28: #{unet_up_forward.2} parent=19 // pred_fallthru
        _
    $region20: #{unet_up_forward.2} parent=5 // pred_fallthru
      _
    %p211 = scmp.le.s32.totalorder 1, %s9
    %p212 = scmp.lt.s32.totalorder %s9, 5
    %p213 = pnand %p211, %p212
    %p214 = pneg %p213
    // Predicated region
    $region29: #{unet_up_forward.2} parent=5 // pred_check
      _
    $region30: #{unet_up_forward.2} parent=5 // pred_check_branch
      %216 = sbr.rel (%p213) target = $region32
    $region31: #{unet_up_forward.2} parent=5 // pred_region
      %s217 = ssub.s32 %s9, 1
      %s218 = smul.u32 16, %s21
      %s219 = smul.u32 8, %s23
      %p220 = scmp.lt.s32.totalorder %s20, 3
      %s221 = scalar_select %p220, %s20, 3
      %p222 = scmp.lt.s32.totalorder %s218, 15
      %s223 = scalar_select %p222, %s218, 15
      %p224 = scmp.lt.s32.totalorder %s219, 7
      %s225 = scalar_select %p224, %s219, 7
      %s226 = smul.addr %s223, 8
      %s227 = sadd.s32 %s225, %s226
      %s228 = smul.addr %s221, 128
      %s229 = sadd.s32 %s227, %s228
      %s230 = smul.addr %s229, 4
      %s231 = scalar_lea.vmem %s0, %s230
      %p232 = pneg %p65
      %p233 = pneg %p62
      %s234 = smul.u32 128, %s23
      %p235 = scmp.lt.s32.totalorder %s20, 3
      %s236 = scalar_select %p235, %s20, 3
      %p237 = scmp.lt.s32.totalorder %s234, 127
      %s238 = scalar_select %p237, %s234, 127
      %p239 = scmp.lt.s32.totalorder %s22, 0
      %s240 = scalar_select %p239, %s22, 0
      %s241 = sadd.s32 %s240, %s238
      %s242 = smul.addr %s236, 128
      %s243 = sadd.s32 %s241, %s242
      %s244 = smul.addr %s243, 4
      %s245 = scalar_lea.vmem %s1, %s244
      %p246 = pneg %p95
      %p247 = pneg %p92
      %p248 = scmp.lt.s32.totalorder %s22, 0
      %s249 = scalar_select %p248, %s22, 0
      %s250 = scalar_lea.vmem %s2, %s249
      %p251 = pneg %p121
      %p252 = pneg %p118
      %p253 = pneg %p151
      %p254 = pneg %p148
      %s255 = smul.u32 16, %s21
      %p256 = scmp.lt.s32.totalorder %s20, 3
      %s257 = scalar_select %p256, %s20, 3
      %p258 = scmp.lt.s32.totalorder %s255, 15
      %s259 = scalar_select %p258, %s255, 15
      %p260 = scmp.lt.s32.totalorder %s22, 0
      %s261 = scalar_select %p260, %s22, 0
      %s262 = sadd.s32 %s261, %s259
      %s263 = smul.addr %s257, 16
      %s264 = sadd.s32 %s262, %s263
      %s265 = smul.addr %s264, 8
      %s266 = scalar_lea.vmem %s3, %s265
      %s267 = smul.u32 16, %s21
      %s268 = smul.u32 8, %s23
      %p269 = scmp.lt.s32.totalorder %s20, 3
      %s270 = scalar_select %p269, %s20, 3
      %p271 = scmp.lt.s32.totalorder %s267, 15
      %s272 = scalar_select %p271, %s267, 15
      %p273 = scmp.lt.s32.totalorder %s268, 7
      %s274 = scalar_select %p273, %s268, 7
      %s275 = smul.addr %s272, 8
      %s276 = sadd.s32 %s274, %s275
      %s277 = smul.addr %s270, 128
      %s278 = sadd.s32 %s276, %s277
      %s279 = smul.addr %s278, 4
      %s280 = scalar_lea.vmem %s0, %s279
      %s281 = smul.u32 16, %s21
      %s282 = smul.u32 8, %s23
      %s283 = smul.u32 128, %s23
      %p284 = scmp.lt.s32.totalorder %s20, 3
      %s285 = scalar_select %p284, %s20, 3
      %p286 = scmp.lt.s32.totalorder %s283, 127
      %s287 = scalar_select %p286, %s283, 127
      %p288 = scmp.lt.s32.totalorder %s22, 0
      %s289 = scalar_select %p288, %s22, 0
      %s290 = sadd.s32 %s289, %s287
      %s291 = smul.addr %s285, 128
      %s292 = sadd.s32 %s290, %s291
      %s293 = smul.addr %s292, 4
      %s294 = scalar_lea.vmem %s1, %s293
      %s295 = smul.u32 128, %s23
      %p296 = scmp.lt.s32.totalorder %s22, 0
      %s297 = scalar_select %p296, %s22, 0
      %s298 = scalar_lea.vmem %s2, %s297
      %s299 = smul.u32 16, %s21
      %p300 = scmp.lt.s32.totalorder %s20, 3
      %s301 = scalar_select %p300, %s20, 3
      %p302 = scmp.lt.s32.totalorder %s299, 15
      %s303 = scalar_select %p302, %s299, 15
      %p304 = scmp.lt.s32.totalorder %s22, 0
      %s305 = scalar_select %p304, %s22, 0
      %s306 = sadd.s32 %s305, %s303
      %s307 = smul.addr %s301, 16
      %s308 = sadd.s32 %s306, %s307
      %s309 = smul.addr %s308, 8
      %s310 = scalar_lea.vmem %s3, %s309
      %s311 = smul.u32 16, %s21
      %p313 = scmp.eq.s32.totalorder %s23, 0
      // Predicated region
      $region33: #{unet_up_forward.2} parent=31 // pred_check
        %p314 = pneg %p313
      $region34: #{unet_up_forward.2} parent=31 // pred_check_branch
        %316 = sbr.rel (%p314) target = $region36
      $region35: #{unet_up_forward.2} parent=31 // pred_region
        %317 = vst [vmem:[#allocation2] sm:$0xff] 0.0
        %318 = vst [vmem:[#allocation2 + $0x8] sm:$0xff] 0.0
        %319 = vst [vmem:[#allocation2 + $0x10] sm:$0xff] 0.0
        %320 = vst [vmem:[#allocation2 + $0x18] sm:$0xff] 0.0
        %321 = vst [vmem:[#allocation2 + $0x20] sm:$0xff] 0.0
        %322 = vst [vmem:[#allocation2 + $0x28] sm:$0xff] 0.0
        %323 = vst [vmem:[#allocation2 + $0x30] sm:$0xff] 0.0
        %324 = vst [vmem:[#allocation2 + $0x38] sm:$0xff] 0.0
        %325 = vst [vmem:[#allocation2 + $0x40] sm:$0xff] 0.0
        %326 = vst [vmem:[#allocation2 + $0x48] sm:$0xff] 0.0
        %327 = vst [vmem:[#allocation2 + $0x50] sm:$0xff] 0.0
        %328 = vst [vmem:[#allocation2 + $0x58] sm:$0xff] 0.0
        %329 = vst [vmem:[#allocation2 + $0x60] sm:$0xff] 0.0
        %330 = vst [vmem:[#allocation2 + $0x68] sm:$0xff] 0.0
        %331 = vst [vmem:[#allocation2 + $0x70] sm:$0xff] 0.0
        %332 = vst [vmem:[#allocation2 + $0x78] sm:$0xff] 0.0
      $region36: #{unet_up_forward.2} parent=31 // pred_fallthru
        _
      %v333 = vld [vmem:[#allocation2] sm:$0xff]
      %v334 = vld [vmem:[#allocation2 + $0x8] sm:$0xff]
      %v335 = vld [vmem:[#allocation2 + $0x10] sm:$0xff]
      %v336 = vld [vmem:[#allocation2 + $0x18] sm:$0xff]
      %v337 = vld [vmem:[#allocation2 + $0x20] sm:$0xff]
      %v338 = vld [vmem:[#allocation2 + $0x28] sm:$0xff]
      %v339 = vld [vmem:[#allocation2 + $0x30] sm:$0xff]
      %v340 = vld [vmem:[#allocation2 + $0x38] sm:$0xff]
      %v341 = vld [vmem:[#allocation2 + $0x40] sm:$0xff]
      %v342 = vld [vmem:[#allocation2 + $0x48] sm:$0xff]
      %v343 = vld [vmem:[#allocation2 + $0x50] sm:$0xff]
      %v344 = vld [vmem:[#allocation2 + $0x58] sm:$0xff]
      %v345 = vld [vmem:[#allocation2 + $0x60] sm:$0xff]
      %v346 = vld [vmem:[#allocation2 + $0x68] sm:$0xff]
      %v347 = vld [vmem:[#allocation2 + $0x70] sm:$0xff]
      %v348 = vld [vmem:[#allocation2 + $0x78] sm:$0xff]
      %v349 = vld [vmem:[%s280] sm:$0xff]
      %v350 = vld [vmem:[%s280 + $0x8] sm:$0xff]
      %v351 = vld [vmem:[%s280 + $0x10] sm:$0xff]
      %v352 = vld [vmem:[%s280 + $0x18] sm:$0xff]
      %v353 = vld [vmem:[%s280 + $0x20] sm:$0xff]
      %v354 = vld [vmem:[%s280 + $0x28] sm:$0xff]
      %v355 = vld [vmem:[%s280 + $0x30] sm:$0xff]
      %v356 = vld [vmem:[%s280 + $0x38] sm:$0xff]
      %v357 = vld [vmem:[%s280 + $0x40] sm:$0xff]
      %v358 = vld [vmem:[%s280 + $0x48] sm:$0xff]
      %v359 = vld [vmem:[%s280 + $0x50] sm:$0xff]
      %v360 = vld [vmem:[%s280 + $0x58] sm:$0xff]
      %v361 = vld [vmem:[%s280 + $0x60] sm:$0xff]
      %v362 = vld [vmem:[%s280 + $0x68] sm:$0xff]
      %v363 = vld [vmem:[%s280 + $0x70] sm:$0xff]
      %v364 = vld [vmem:[%s280 + $0x78] sm:$0xff]
      %v365 = vld [vmem:[%s280 + $0x80] sm:$0xff]
      %v366 = vld [vmem:[%s280 + $0x88] sm:$0xff]
      %v367 = vld [vmem:[%s280 + $0x90] sm:$0xff]
      %v368 = vld [vmem:[%s280 + $0x98] sm:$0xff]
      %v369 = vld [vmem:[%s280 + $0xa0] sm:$0xff]
      %v370 = vld [vmem:[%s280 + $0xa8] sm:$0xff]
      %v371 = vld [vmem:[%s280 + $0xb0] sm:$0xff]
      %v372 = vld [vmem:[%s280 + $0xb8] sm:$0xff]
      %v373 = vld [vmem:[%s280 + $0xc0] sm:$0xff]
      %v374 = vld [vmem:[%s280 + $0xc8] sm:$0xff]
      %v375 = vld [vmem:[%s280 + $0xd0] sm:$0xff]
      %v376 = vld [vmem:[%s280 + $0xd8] sm:$0xff]
      %v377 = vld [vmem:[%s280 + $0xe0] sm:$0xff]
      %v378 = vld [vmem:[%s280 + $0xe8] sm:$0xff]
      %v379 = vld [vmem:[%s280 + $0xf0] sm:$0xff]
      %v380 = vld [vmem:[%s280 + $0xf8] sm:$0xff]
      %v381 = vld [vmem:[%s280 + $0x100] sm:$0xff]
      %v382 = vld [vmem:[%s280 + $0x108] sm:$0xff]
      %v383 = vld [vmem:[%s280 + $0x110] sm:$0xff]
      %v384 = vld [vmem:[%s280 + $0x118] sm:$0xff]
      %v385 = vld [vmem:[%s280 + $0x120] sm:$0xff]
      %v386 = vld [vmem:[%s280 + $0x128] sm:$0xff]
      %v387 = vld [vmem:[%s280 + $0x130] sm:$0xff]
      %v388 = vld [vmem:[%s280 + $0x138] sm:$0xff]
      %v389 = vld [vmem:[%s280 + $0x140] sm:$0xff]
      %v390 = vld [vmem:[%s280 + $0x148] sm:$0xff]
      %v391 = vld [vmem:[%s280 + $0x150] sm:$0xff]
      %v392 = vld [vmem:[%s280 + $0x158] sm:$0xff]
      %v393 = vld [vmem:[%s280 + $0x160] sm:$0xff]
      %v394 = vld [vmem:[%s280 + $0x168] sm:$0xff]
      %v395 = vld [vmem:[%s280 + $0x170] sm:$0xff]
      %v396 = vld [vmem:[%s280 + $0x178] sm:$0xff]
      %v397 = vld [vmem:[%s280 + $0x180] sm:$0xff]
      %v398 = vld [vmem:[%s280 + $0x188] sm:$0xff]
      %v399 = vld [vmem:[%s280 + $0x190] sm:$0xff]
      %v400 = vld [vmem:[%s280 + $0x198] sm:$0xff]
      %v401 = vld [vmem:[%s280 + $0x1a0] sm:$0xff]
      %v402 = vld [vmem:[%s280 + $0x1a8] sm:$0xff]
      %v403 = vld [vmem:[%s280 + $0x1b0] sm:$0xff]
      %v404 = vld [vmem:[%s280 + $0x1b8] sm:$0xff]
      %v405 = vld [vmem:[%s280 + $0x1c0] sm:$0xff]
      %v406 = vld [vmem:[%s280 + $0x1c8] sm:$0xff]
      %v407 = vld [vmem:[%s280 + $0x1d0] sm:$0xff]
      %v408 = vld [vmem:[%s280 + $0x1d8] sm:$0xff]
      %v409 = vld [vmem:[%s280 + $0x1e0] sm:$0xff]
      %v410 = vld [vmem:[%s280 + $0x1e8] sm:$0xff]
      %v411 = vld [vmem:[%s280 + $0x1f0] sm:$0xff]
      %v412 = vld [vmem:[%s280 + $0x1f8] sm:$0xff]
      %v413 = vld [vmem:[%s294] sm:$0xf]
      %v414 = vld [vmem:[%s294 + $0x4] sm:$0xf]
      %v415 = vld [vmem:[%s294 + $0x8] sm:$0xf]
      %v416 = vld [vmem:[%s294 + $0xc] sm:$0xf]
      %v417 = vld [vmem:[%s294 + $0x10] sm:$0xf]
      %v418 = vld [vmem:[%s294 + $0x14] sm:$0xf]
      %v419 = vld [vmem:[%s294 + $0x18] sm:$0xf]
      %v420 = vld [vmem:[%s294 + $0x1c] sm:$0xf]
      %v421 = vld [vmem:[%s294 + $0x20] sm:$0xf]
      %v422 = vld [vmem:[%s294 + $0x24] sm:$0xf]
      %v423 = vld [vmem:[%s294 + $0x28] sm:$0xf]
      %v424 = vld [vmem:[%s294 + $0x2c] sm:$0xf]
      %v425 = vld [vmem:[%s294 + $0x30] sm:$0xf]
      %v426 = vld [vmem:[%s294 + $0x34] sm:$0xf]
      %v427 = vld [vmem:[%s294 + $0x38] sm:$0xf]
      %v428 = vld [vmem:[%s294 + $0x3c] sm:$0xf]
      %v429 = vld [vmem:[%s294 + $0x40] sm:$0xf]
      %v430 = vld [vmem:[%s294 + $0x44] sm:$0xf]
      %v431 = vld [vmem:[%s294 + $0x48] sm:$0xf]
      %v432 = vld [vmem:[%s294 + $0x4c] sm:$0xf]
      %v433 = vld [vmem:[%s294 + $0x50] sm:$0xf]
      %v434 = vld [vmem:[%s294 + $0x54] sm:$0xf]
      %v435 = vld [vmem:[%s294 + $0x58] sm:$0xf]
      %v436 = vld [vmem:[%s294 + $0x5c] sm:$0xf]
      %v437 = vld [vmem:[%s294 + $0x60] sm:$0xf]
      %v438 = vld [vmem:[%s294 + $0x64] sm:$0xf]
      %v439 = vld [vmem:[%s294 + $0x68] sm:$0xf]
      %v440 = vld [vmem:[%s294 + $0x6c] sm:$0xf]
      %v441 = vld [vmem:[%s294 + $0x70] sm:$0xf]
      %v442 = vld [vmem:[%s294 + $0x74] sm:$0xf]
      %v443 = vld [vmem:[%s294 + $0x78] sm:$0xf]
      %v444 = vld [vmem:[%s294 + $0x7c] sm:$0xf]
      %v445 = vld [vmem:[%s294 + $0x80] sm:$0xf]
      %v446 = vld [vmem:[%s294 + $0x84] sm:$0xf]
      %v447 = vld [vmem:[%s294 + $0x88] sm:$0xf]
      %v448 = vld [vmem:[%s294 + $0x8c] sm:$0xf]
      %v449 = vld [vmem:[%s294 + $0x90] sm:$0xf]
      %v450 = vld [vmem:[%s294 + $0x94] sm:$0xf]
      %v451 = vld [vmem:[%s294 + $0x98] sm:$0xf]
      %v452 = vld [vmem:[%s294 + $0x9c] sm:$0xf]
      %v453 = vld [vmem:[%s294 + $0xa0] sm:$0xf]
      %v454 = vld [vmem:[%s294 + $0xa4] sm:$0xf]
      %v455 = vld [vmem:[%s294 + $0xa8] sm:$0xf]
      %v456 = vld [vmem:[%s294 + $0xac] sm:$0xf]
      %v457 = vld [vmem:[%s294 + $0xb0] sm:$0xf]
      %v458 = vld [vmem:[%s294 + $0xb4] sm:$0xf]
      %v459 = vld [vmem:[%s294 + $0xb8] sm:$0xf]
      %v460 = vld [vmem:[%s294 + $0xbc] sm:$0xf]
      %v461 = vld [vmem:[%s294 + $0xc0] sm:$0xf]
      %v462 = vld [vmem:[%s294 + $0xc4] sm:$0xf]
      %v463 = vld [vmem:[%s294 + $0xc8] sm:$0xf]
      %v464 = vld [vmem:[%s294 + $0xcc] sm:$0xf]
      %v465 = vld [vmem:[%s294 + $0xd0] sm:$0xf]
      %v466 = vld [vmem:[%s294 + $0xd4] sm:$0xf]
      %v467 = vld [vmem:[%s294 + $0xd8] sm:$0xf]
      %v468 = vld [vmem:[%s294 + $0xdc] sm:$0xf]
      %v469 = vld [vmem:[%s294 + $0xe0] sm:$0xf]
      %v470 = vld [vmem:[%s294 + $0xe4] sm:$0xf]
      %v471 = vld [vmem:[%s294 + $0xe8] sm:$0xf]
      %v472 = vld [vmem:[%s294 + $0xec] sm:$0xf]
      %v473 = vld [vmem:[%s294 + $0xf0] sm:$0xf]
      %v474 = vld [vmem:[%s294 + $0xf4] sm:$0xf]
      %v475 = vld [vmem:[%s294 + $0xf8] sm:$0xf]
      %v476 = vld [vmem:[%s294 + $0xfc] sm:$0xf]
      %v477 = vld [vmem:[%s294 + $0x100] sm:$0xf]
      %v478 = vld [vmem:[%s294 + $0x104] sm:$0xf]
      %v479 = vld [vmem:[%s294 + $0x108] sm:$0xf]
      %v480 = vld [vmem:[%s294 + $0x10c] sm:$0xf]
      %v481 = vld [vmem:[%s294 + $0x110] sm:$0xf]
      %v482 = vld [vmem:[%s294 + $0x114] sm:$0xf]
      %v483 = vld [vmem:[%s294 + $0x118] sm:$0xf]
      %v484 = vld [vmem:[%s294 + $0x11c] sm:$0xf]
      %v485 = vld [vmem:[%s294 + $0x120] sm:$0xf]
      %v486 = vld [vmem:[%s294 + $0x124] sm:$0xf]
      %v487 = vld [vmem:[%s294 + $0x128] sm:$0xf]
      %v488 = vld [vmem:[%s294 + $0x12c] sm:$0xf]
      %v489 = vld [vmem:[%s294 + $0x130] sm:$0xf]
      %v490 = vld [vmem:[%s294 + $0x134] sm:$0xf]
      %v491 = vld [vmem:[%s294 + $0x138] sm:$0xf]
      %v492 = vld [vmem:[%s294 + $0x13c] sm:$0xf]
      %v493 = vld [vmem:[%s294 + $0x140] sm:$0xf]
      %v494 = vld [vmem:[%s294 + $0x144] sm:$0xf]
      %v495 = vld [vmem:[%s294 + $0x148] sm:$0xf]
      %v496 = vld [vmem:[%s294 + $0x14c] sm:$0xf]
      %v497 = vld [vmem:[%s294 + $0x150] sm:$0xf]
      %v498 = vld [vmem:[%s294 + $0x154] sm:$0xf]
      %v499 = vld [vmem:[%s294 + $0x158] sm:$0xf]
      %v500 = vld [vmem:[%s294 + $0x15c] sm:$0xf]
      %v501 = vld [vmem:[%s294 + $0x160] sm:$0xf]
      %v502 = vld [vmem:[%s294 + $0x164] sm:$0xf]
      %v503 = vld [vmem:[%s294 + $0x168] sm:$0xf]
      %v504 = vld [vmem:[%s294 + $0x16c] sm:$0xf]
      %v505 = vld [vmem:[%s294 + $0x170] sm:$0xf]
      %v506 = vld [vmem:[%s294 + $0x174] sm:$0xf]
      %v507 = vld [vmem:[%s294 + $0x178] sm:$0xf]
      %v508 = vld [vmem:[%s294 + $0x17c] sm:$0xf]
      %v509 = vld [vmem:[%s294 + $0x180] sm:$0xf]
      %v510 = vld [vmem:[%s294 + $0x184] sm:$0xf]
      %v511 = vld [vmem:[%s294 + $0x188] sm:$0xf]
      %v512 = vld [vmem:[%s294 + $0x18c] sm:$0xf]
      %v513 = vld [vmem:[%s294 + $0x190] sm:$0xf]
      %v514 = vld [vmem:[%s294 + $0x194] sm:$0xf]
      %v515 = vld [vmem:[%s294 + $0x198] sm:$0xf]
      %v516 = vld [vmem:[%s294 + $0x19c] sm:$0xf]
      %v517 = vld [vmem:[%s294 + $0x1a0] sm:$0xf]
      %v518 = vld [vmem:[%s294 + $0x1a4] sm:$0xf]
      %v519 = vld [vmem:[%s294 + $0x1a8] sm:$0xf]
      %v520 = vld [vmem:[%s294 + $0x1ac] sm:$0xf]
      %v521 = vld [vmem:[%s294 + $0x1b0] sm:$0xf]
      %v522 = vld [vmem:[%s294 + $0x1b4] sm:$0xf]
      %v523 = vld [vmem:[%s294 + $0x1b8] sm:$0xf]
      %v524 = vld [vmem:[%s294 + $0x1bc] sm:$0xf]
      %v525 = vld [vmem:[%s294 + $0x1c0] sm:$0xf]
      %v526 = vld [vmem:[%s294 + $0x1c4] sm:$0xf]
      %v527 = vld [vmem:[%s294 + $0x1c8] sm:$0xf]
      %v528 = vld [vmem:[%s294 + $0x1cc] sm:$0xf]
      %v529 = vld [vmem:[%s294 + $0x1d0] sm:$0xf]
      %v530 = vld [vmem:[%s294 + $0x1d4] sm:$0xf]
      %v531 = vld [vmem:[%s294 + $0x1d8] sm:$0xf]
      %v532 = vld [vmem:[%s294 + $0x1dc] sm:$0xf]
      %v533 = vld [vmem:[%s294 + $0x1e0] sm:$0xf]
      %v534 = vld [vmem:[%s294 + $0x1e4] sm:$0xf]
      %v535 = vld [vmem:[%s294 + $0x1e8] sm:$0xf]
      %v536 = vld [vmem:[%s294 + $0x1ec] sm:$0xf]
      %v537 = vld [vmem:[%s294 + $0x1f0] sm:$0xf]
      %v538 = vld [vmem:[%s294 + $0x1f4] sm:$0xf]
      %v539 = vld [vmem:[%s294 + $0x1f8] sm:$0xf]
      %v540 = vld [vmem:[%s294 + $0x1fc] sm:$0xf]
      %v605 = vunpack.c.l.b16 %v349
      %v606 = vunpack.c.h.b16 %v349
      %v607 = vunpack.c.l.b16 %v350
      %v608 = vunpack.c.h.b16 %v350
      %v609 = vunpack.c.l.b16 %v351
      %v610 = vunpack.c.h.b16 %v351
      %v611 = vunpack.c.l.b16 %v352
      %v612 = vunpack.c.h.b16 %v352
      %v613 = vunpack.c.l.b16 %v353
      %v614 = vunpack.c.h.b16 %v353
      %v615 = vunpack.c.l.b16 %v354
      %v616 = vunpack.c.h.b16 %v354
      %v617 = vunpack.c.l.b16 %v355
      %v618 = vunpack.c.h.b16 %v355
      %v619 = vunpack.c.l.b16 %v356
      %v620 = vunpack.c.h.b16 %v356
      %v621 = vunpack.c.l.b16 %v357
      %v622 = vunpack.c.h.b16 %v357
      %v623 = vunpack.c.l.b16 %v358
      %v624 = vunpack.c.h.b16 %v358
      %v625 = vunpack.c.l.b16 %v359
      %v626 = vunpack.c.h.b16 %v359
      %v627 = vunpack.c.l.b16 %v360
      %v628 = vunpack.c.h.b16 %v360
      %v629 = vunpack.c.l.b16 %v361
      %v630 = vunpack.c.h.b16 %v361
      %v631 = vunpack.c.l.b16 %v362
      %v632 = vunpack.c.h.b16 %v362
      %v633 = vunpack.c.l.b16 %v363
      %v634 = vunpack.c.h.b16 %v363
      %v635 = vunpack.c.l.b16 %v364
      %v636 = vunpack.c.h.b16 %v364
      %v637 = vunpack.c.l.b16 %v365
      %v638 = vunpack.c.h.b16 %v365
      %v639 = vunpack.c.l.b16 %v366
      %v640 = vunpack.c.h.b16 %v366
      %v641 = vunpack.c.l.b16 %v367
      %v642 = vunpack.c.h.b16 %v367
      %v643 = vunpack.c.l.b16 %v368
      %v644 = vunpack.c.h.b16 %v368
      %v645 = vunpack.c.l.b16 %v369
      %v646 = vunpack.c.h.b16 %v369
      %v647 = vunpack.c.l.b16 %v370
      %v648 = vunpack.c.h.b16 %v370
      %v649 = vunpack.c.l.b16 %v371
      %v650 = vunpack.c.h.b16 %v371
      %v651 = vunpack.c.l.b16 %v372
      %v652 = vunpack.c.h.b16 %v372
      %v653 = vunpack.c.l.b16 %v373
      %v654 = vunpack.c.h.b16 %v373
      %v655 = vunpack.c.l.b16 %v374
      %v656 = vunpack.c.h.b16 %v374
      %v657 = vunpack.c.l.b16 %v375
      %v658 = vunpack.c.h.b16 %v375
      %v659 = vunpack.c.l.b16 %v376
      %v660 = vunpack.c.h.b16 %v376
      %v661 = vunpack.c.l.b16 %v377
      %v662 = vunpack.c.h.b16 %v377
      %v663 = vunpack.c.l.b16 %v378
      %v664 = vunpack.c.h.b16 %v378
      %v665 = vunpack.c.l.b16 %v379
      %v666 = vunpack.c.h.b16 %v379
      %v667 = vunpack.c.l.b16 %v380
      %v668 = vunpack.c.h.b16 %v380
      %v669 = vunpack.c.l.b16 %v381
      %v670 = vunpack.c.h.b16 %v381
      %v671 = vunpack.c.l.b16 %v382
      %v672 = vunpack.c.h.b16 %v382
      %v673 = vunpack.c.l.b16 %v383
      %v674 = vunpack.c.h.b16 %v383
      %v675 = vunpack.c.l.b16 %v384
      %v676 = vunpack.c.h.b16 %v384
      %v677 = vunpack.c.l.b16 %v385
      %v678 = vunpack.c.h.b16 %v385
      %v679 = vunpack.c.l.b16 %v386
      %v680 = vunpack.c.h.b16 %v386
      %v681 = vunpack.c.l.b16 %v387
      %v682 = vunpack.c.h.b16 %v387
      %v683 = vunpack.c.l.b16 %v388
      %v684 = vunpack.c.h.b16 %v388
      %v685 = vunpack.c.l.b16 %v389
      %v686 = vunpack.c.h.b16 %v389
      %v687 = vunpack.c.l.b16 %v390
      %v688 = vunpack.c.h.b16 %v390
      %v689 = vunpack.c.l.b16 %v391
      %v690 = vunpack.c.h.b16 %v391
      %v691 = vunpack.c.l.b16 %v392
      %v692 = vunpack.c.h.b16 %v392
      %v693 = vunpack.c.l.b16 %v393
      %v694 = vunpack.c.h.b16 %v393
      %v695 = vunpack.c.l.b16 %v394
      %v696 = vunpack.c.h.b16 %v394
      %v697 = vunpack.c.l.b16 %v395
      %v698 = vunpack.c.h.b16 %v395
      %v699 = vunpack.c.l.b16 %v396
      %v700 = vunpack.c.h.b16 %v396
      %v701 = vunpack.c.l.b16 %v397
      %v702 = vunpack.c.h.b16 %v397
      %v703 = vunpack.c.l.b16 %v398
      %v704 = vunpack.c.h.b16 %v398
      %v705 = vunpack.c.l.b16 %v399
      %v706 = vunpack.c.h.b16 %v399
      %v707 = vunpack.c.l.b16 %v400
      %v708 = vunpack.c.h.b16 %v400
      %v709 = vunpack.c.l.b16 %v401
      %v710 = vunpack.c.h.b16 %v401
      %v711 = vunpack.c.l.b16 %v402
      %v712 = vunpack.c.h.b16 %v402
      %v713 = vunpack.c.l.b16 %v403
      %v714 = vunpack.c.h.b16 %v403
      %v715 = vunpack.c.l.b16 %v404
      %v716 = vunpack.c.h.b16 %v404
      %v717 = vunpack.c.l.b16 %v405
      %v718 = vunpack.c.h.b16 %v405
      %v719 = vunpack.c.l.b16 %v406
      %v720 = vunpack.c.h.b16 %v406
      %v721 = vunpack.c.l.b16 %v407
      %v722 = vunpack.c.h.b16 %v407
      %v723 = vunpack.c.l.b16 %v408
      %v724 = vunpack.c.h.b16 %v408
      %v725 = vunpack.c.l.b16 %v409
      %v726 = vunpack.c.h.b16 %v409
      %v727 = vunpack.c.l.b16 %v410
      %v728 = vunpack.c.h.b16 %v410
      %v729 = vunpack.c.l.b16 %v411
      %v730 = vunpack.c.h.b16 %v411
      %v731 = vunpack.c.l.b16 %v412
      %v732 = vunpack.c.h.b16 %v412
      %v733 = vpack.c.b16 %v613, %v605
      %v734 = vpack.c.b16 %v614, %v606
      %v735 = vpack.c.b16 %v615, %v607
      %v736 = vpack.c.b16 %v616, %v608
      %v737 = vpack.c.b16 %v617, %v609
      %v738 = vpack.c.b16 %v618, %v610
      %v739 = vpack.c.b16 %v619, %v611
      %v740 = vpack.c.b16 %v620, %v612
      %v741 = vpack.c.b16 %v629, %v621
      %v742 = vpack.c.b16 %v630, %v622
      %v743 = vpack.c.b16 %v631, %v623
      %v744 = vpack.c.b16 %v632, %v624
      %v745 = vpack.c.b16 %v633, %v625
      %v746 = vpack.c.b16 %v634, %v626
      %v747 = vpack.c.b16 %v635, %v627
      %v748 = vpack.c.b16 %v636, %v628
      %v749 = vpack.c.b16 %v645, %v637
      %v750 = vpack.c.b16 %v646, %v638
      %v751 = vpack.c.b16 %v647, %v639
      %v752 = vpack.c.b16 %v648, %v640
      %v753 = vpack.c.b16 %v649, %v641
      %v754 = vpack.c.b16 %v650, %v642
      %v755 = vpack.c.b16 %v651, %v643
      %v756 = vpack.c.b16 %v652, %v644
      %v757 = vpack.c.b16 %v661, %v653
      %v758 = vpack.c.b16 %v662, %v654
      %v759 = vpack.c.b16 %v663, %v655
      %v760 = vpack.c.b16 %v664, %v656
      %v761 = vpack.c.b16 %v665, %v657
      %v762 = vpack.c.b16 %v666, %v658
      %v763 = vpack.c.b16 %v667, %v659
      %v764 = vpack.c.b16 %v668, %v660
      %v765 = vpack.c.b16 %v677, %v669
      %v766 = vpack.c.b16 %v678, %v670
      %v767 = vpack.c.b16 %v679, %v671
      %v768 = vpack.c.b16 %v680, %v672
      %v769 = vpack.c.b16 %v681, %v673
      %v770 = vpack.c.b16 %v682, %v674
      %v771 = vpack.c.b16 %v683, %v675
      %v772 = vpack.c.b16 %v684, %v676
      %v773 = vpack.c.b16 %v693, %v685
      %v774 = vpack.c.b16 %v694, %v686
      %v775 = vpack.c.b16 %v695, %v687
      %v776 = vpack.c.b16 %v696, %v688
      %v777 = vpack.c.b16 %v697, %v689
      %v778 = vpack.c.b16 %v698, %v690
      %v779 = vpack.c.b16 %v699, %v691
      %v780 = vpack.c.b16 %v700, %v692
      %v781 = vpack.c.b16 %v709, %v701
      %v782 = vpack.c.b16 %v710, %v702
      %v783 = vpack.c.b16 %v711, %v703
      %v784 = vpack.c.b16 %v712, %v704
      %v785 = vpack.c.b16 %v713, %v705
      %v786 = vpack.c.b16 %v714, %v706
      %v787 = vpack.c.b16 %v715, %v707
      %v788 = vpack.c.b16 %v716, %v708
      %v789 = vpack.c.b16 %v725, %v717
      %v790 = vpack.c.b16 %v726, %v718
      %v791 = vpack.c.b16 %v727, %v719
      %v792 = vpack.c.b16 %v728, %v720
      %v793 = vpack.c.b16 %v729, %v721
      %v794 = vpack.c.b16 %v730, %v722
      %v795 = vpack.c.b16 %v731, %v723
      %v796 = vpack.c.b16 %v732, %v724
      %v989 = vunpack.c.l.b16 %v413
      %v990 = vunpack.c.l.b16 %v414
      %v991 = vunpack.c.l.b16 %v415
      %v992 = vunpack.c.l.b16 %v416
      %v993 = vunpack.c.l.b16 %v417
      %v994 = vunpack.c.l.b16 %v418
      %v995 = vunpack.c.l.b16 %v419
      %v996 = vunpack.c.l.b16 %v420
      %v997 = vunpack.c.l.b16 %v421
      %v998 = vunpack.c.l.b16 %v422
      %v999 = vunpack.c.l.b16 %v423
      %v1000 = vunpack.c.l.b16 %v424
      %v1001 = vunpack.c.l.b16 %v425
      %v1002 = vunpack.c.l.b16 %v426
      %v1003 = vunpack.c.l.b16 %v427
      %v1004 = vunpack.c.l.b16 %v428
      %v1005 = vunpack.c.l.b16 %v429
      %v1006 = vunpack.c.l.b16 %v430
      %v1007 = vunpack.c.l.b16 %v431
      %v1008 = vunpack.c.l.b16 %v432
      %v1009 = vunpack.c.l.b16 %v433
      %v1010 = vunpack.c.l.b16 %v434
      %v1011 = vunpack.c.l.b16 %v435
      %v1012 = vunpack.c.l.b16 %v436
      %v1013 = vunpack.c.l.b16 %v437
      %v1014 = vunpack.c.l.b16 %v438
      %v1015 = vunpack.c.l.b16 %v439
      %v1016 = vunpack.c.l.b16 %v440
      %v1017 = vunpack.c.l.b16 %v441
      %v1018 = vunpack.c.l.b16 %v442
      %v1019 = vunpack.c.l.b16 %v443
      %v1020 = vunpack.c.l.b16 %v444
      %v1021 = vunpack.c.l.b16 %v445
      %v1022 = vunpack.c.l.b16 %v446
      %v1023 = vunpack.c.l.b16 %v447
      %v1024 = vunpack.c.l.b16 %v448
      %v1025 = vunpack.c.l.b16 %v449
      %v1026 = vunpack.c.l.b16 %v450
      %v1027 = vunpack.c.l.b16 %v451
      %v1028 = vunpack.c.l.b16 %v452
      %v1029 = vunpack.c.l.b16 %v453
      %v1030 = vunpack.c.l.b16 %v454
      %v1031 = vunpack.c.l.b16 %v455
      %v1032 = vunpack.c.l.b16 %v456
      %v1033 = vunpack.c.l.b16 %v457
      %v1034 = vunpack.c.l.b16 %v458
      %v1035 = vunpack.c.l.b16 %v459
      %v1036 = vunpack.c.l.b16 %v460
      %v1037 = vunpack.c.l.b16 %v461
      %v1038 = vunpack.c.l.b16 %v462
      %v1039 = vunpack.c.l.b16 %v463
      %v1040 = vunpack.c.l.b16 %v464
      %v1041 = vunpack.c.l.b16 %v465
      %v1042 = vunpack.c.l.b16 %v466
      %v1043 = vunpack.c.l.b16 %v467
      %v1044 = vunpack.c.l.b16 %v468
      %v1045 = vunpack.c.l.b16 %v469
      %v1046 = vunpack.c.l.b16 %v470
      %v1047 = vunpack.c.l.b16 %v471
      %v1048 = vunpack.c.l.b16 %v472
      %v1049 = vunpack.c.l.b16 %v473
      %v1050 = vunpack.c.l.b16 %v474
      %v1051 = vunpack.c.l.b16 %v475
      %v1052 = vunpack.c.l.b16 %v476
      %v1053 = vunpack.c.l.b16 %v477
      %v1054 = vunpack.c.l.b16 %v478
      %v1055 = vunpack.c.l.b16 %v479
      %v1056 = vunpack.c.l.b16 %v480
      %v1057 = vunpack.c.l.b16 %v481
      %v1058 = vunpack.c.l.b16 %v482
      %v1059 = vunpack.c.l.b16 %v483
      %v1060 = vunpack.c.l.b16 %v484
      %v1061 = vunpack.c.l.b16 %v485
      %v1062 = vunpack.c.l.b16 %v486
      %v1063 = vunpack.c.l.b16 %v487
      %v1064 = vunpack.c.l.b16 %v488
      %v1065 = vunpack.c.l.b16 %v489
      %v1066 = vunpack.c.l.b16 %v490
      %v1067 = vunpack.c.l.b16 %v491
      %v1068 = vunpack.c.l.b16 %v492
      %v1069 = vunpack.c.l.b16 %v493
      %v1070 = vunpack.c.l.b16 %v494
      %v1071 = vunpack.c.l.b16 %v495
      %v1072 = vunpack.c.l.b16 %v496
      %v1073 = vunpack.c.l.b16 %v497
      %v1074 = vunpack.c.l.b16 %v498
      %v1075 = vunpack.c.l.b16 %v499
      %v1076 = vunpack.c.l.b16 %v500
      %v1077 = vunpack.c.l.b16 %v501
      %v1078 = vunpack.c.l.b16 %v502
      %v1079 = vunpack.c.l.b16 %v503
      %v1080 = vunpack.c.l.b16 %v504
      %v1081 = vunpack.c.l.b16 %v505
      %v1082 = vunpack.c.l.b16 %v506
      %v1083 = vunpack.c.l.b16 %v507
      %v1084 = vunpack.c.l.b16 %v508
      %v1085 = vunpack.c.l.b16 %v509
      %v1086 = vunpack.c.l.b16 %v510
      %v1087 = vunpack.c.l.b16 %v511
      %v1088 = vunpack.c.l.b16 %v512
      %v1089 = vunpack.c.l.b16 %v513
      %v1090 = vunpack.c.l.b16 %v514
      %v1091 = vunpack.c.l.b16 %v515
      %v1092 = vunpack.c.l.b16 %v516
      %v1093 = vunpack.c.l.b16 %v517
      %v1094 = vunpack.c.l.b16 %v518
      %v1095 = vunpack.c.l.b16 %v519
      %v1096 = vunpack.c.l.b16 %v520
      %v1097 = vunpack.c.l.b16 %v521
      %v1098 = vunpack.c.l.b16 %v522
      %v1099 = vunpack.c.l.b16 %v523
      %v1100 = vunpack.c.l.b16 %v524
      %v1101 = vunpack.c.l.b16 %v525
      %v1102 = vunpack.c.l.b16 %v526
      %v1103 = vunpack.c.l.b16 %v527
      %v1104 = vunpack.c.l.b16 %v528
      %v1105 = vunpack.c.l.b16 %v529
      %v1106 = vunpack.c.l.b16 %v530
      %v1107 = vunpack.c.l.b16 %v531
      %v1108 = vunpack.c.l.b16 %v532
      %v1109 = vunpack.c.l.b16 %v533
      %v1110 = vunpack.c.l.b16 %v534
      %v1111 = vunpack.c.l.b16 %v535
      %v1112 = vunpack.c.l.b16 %v536
      %v1113 = vunpack.c.l.b16 %v537
      %v1114 = vunpack.c.l.b16 %v538
      %v1115 = vunpack.c.l.b16 %v539
      %v1116 = vunpack.c.l.b16 %v540
      %v1117 = vpack.c.b16 %v990, %v989
      %v1118 = vpack.c.b16 %v992, %v991
      %v1119 = vpack.c.b16 %v994, %v993
      %v1120 = vpack.c.b16 %v996, %v995
      %v1121 = vpack.c.b16 %v998, %v997
      %v1122 = vpack.c.b16 %v1000, %v999
      %v1123 = vpack.c.b16 %v1002, %v1001
      %v1124 = vpack.c.b16 %v1004, %v1003
      %v1125 = vpack.c.b16 %v1006, %v1005
      %v1126 = vpack.c.b16 %v1008, %v1007
      %v1127 = vpack.c.b16 %v1010, %v1009
      %v1128 = vpack.c.b16 %v1012, %v1011
      %v1129 = vpack.c.b16 %v1014, %v1013
      %v1130 = vpack.c.b16 %v1016, %v1015
      %v1131 = vpack.c.b16 %v1018, %v1017
      %v1132 = vpack.c.b16 %v1020, %v1019
      %v1133 = vpack.c.b16 %v1022, %v1021
      %v1134 = vpack.c.b16 %v1024, %v1023
      %v1135 = vpack.c.b16 %v1026, %v1025
      %v1136 = vpack.c.b16 %v1028, %v1027
      %v1137 = vpack.c.b16 %v1030, %v1029
      %v1138 = vpack.c.b16 %v1032, %v1031
      %v1139 = vpack.c.b16 %v1034, %v1033
      %v1140 = vpack.c.b16 %v1036, %v1035
      %v1141 = vpack.c.b16 %v1038, %v1037
      %v1142 = vpack.c.b16 %v1040, %v1039
      %v1143 = vpack.c.b16 %v1042, %v1041
      %v1144 = vpack.c.b16 %v1044, %v1043
      %v1145 = vpack.c.b16 %v1046, %v1045
      %v1146 = vpack.c.b16 %v1048, %v1047
      %v1147 = vpack.c.b16 %v1050, %v1049
      %v1148 = vpack.c.b16 %v1052, %v1051
      %v1149 = vpack.c.b16 %v1054, %v1053
      %v1150 = vpack.c.b16 %v1056, %v1055
      %v1151 = vpack.c.b16 %v1058, %v1057
      %v1152 = vpack.c.b16 %v1060, %v1059
      %v1153 = vpack.c.b16 %v1062, %v1061
      %v1154 = vpack.c.b16 %v1064, %v1063
      %v1155 = vpack.c.b16 %v1066, %v1065
      %v1156 = vpack.c.b16 %v1068, %v1067
      %v1157 = vpack.c.b16 %v1070, %v1069
      %v1158 = vpack.c.b16 %v1072, %v1071
      %v1159 = vpack.c.b16 %v1074, %v1073
      %v1160 = vpack.c.b16 %v1076, %v1075
      %v1161 = vpack.c.b16 %v1078, %v1077
      %v1162 = vpack.c.b16 %v1080, %v1079
      %v1163 = vpack.c.b16 %v1082, %v1081
      %v1164 = vpack.c.b16 %v1084, %v1083
      %v1165 = vpack.c.b16 %v1086, %v1085
      %v1166 = vpack.c.b16 %v1088, %v1087
      %v1167 = vpack.c.b16 %v1090, %v1089
      %v1168 = vpack.c.b16 %v1092, %v1091
      %v1169 = vpack.c.b16 %v1094, %v1093
      %v1170 = vpack.c.b16 %v1096, %v1095
      %v1171 = vpack.c.b16 %v1098, %v1097
      %v1172 = vpack.c.b16 %v1100, %v1099
      %v1173 = vpack.c.b16 %v1102, %v1101
      %v1174 = vpack.c.b16 %v1104, %v1103
      %v1175 = vpack.c.b16 %v1106, %v1105
      %v1176 = vpack.c.b16 %v1108, %v1107
      %v1177 = vpack.c.b16 %v1110, %v1109
      %v1178 = vpack.c.b16 %v1112, %v1111
      %v1179 = vpack.c.b16 %v1114, %v1113
      %v1180 = vpack.c.b16 %v1116, %v1115
      %1245 = vmatprep.subr.bf16.mxu0 0
      %1246 = vmatpush1.bf16.msra.mxu0 %v1117
      %1247 = vmatprep.subr.bf16.mxu0 0
      %1248 = vmatpush1.bf16.msra.mxu0 %v1118
      %1249 = vmatprep.subr.bf16.mxu0 0
      %1250 = vmatpush1.bf16.msra.mxu0 %v1119
      %1251 = vmatprep.subr.bf16.mxu0 0
      %1252 = vmatpush1.bf16.msra.mxu0 %v1120
      %1253 = vmatprep.subr.bf16.mxu0 0
      %1254 = vmatpush1.bf16.msra.mxu0 %v1121
      %1255 = vmatprep.subr.bf16.mxu0 0
      %1256 = vmatpush1.bf16.msra.mxu0 %v1122
      %1257 = vmatprep.subr.bf16.mxu0 0
      %1258 = vmatpush1.bf16.msra.mxu0 %v1123
      %1259 = vmatprep.subr.bf16.mxu0 0
      %1260 = vmatpush1.bf16.msra.mxu0 %v1124
      %1261 = vmatprep.subr.bf16.mxu0 0
      %1262 = vmatpush1.bf16.msra.mxu0 %v1125
      %1263 = vmatprep.subr.bf16.mxu0 0
      %1264 = vmatpush1.bf16.msra.mxu0 %v1126
      %1265 = vmatprep.subr.bf16.mxu0 0
      %1266 = vmatpush1.bf16.msra.mxu0 %v1127
      %1267 = vmatprep.subr.bf16.mxu0 0
      %1268 = vmatpush1.bf16.msra.mxu0 %v1128
      %1269 = vmatprep.subr.bf16.mxu0 0
      %1270 = vmatpush1.bf16.msra.mxu0 %v1129
      %1271 = vmatprep.subr.bf16.mxu0 0
      %1272 = vmatpush1.bf16.msra.mxu0 %v1130
      %1273 = vmatprep.subr.bf16.mxu0 0
      %1274 = vmatpush1.bf16.msra.mxu0 %v1131
      %1275 = vmatprep.subr.bf16.mxu0 0
      %1276 = vmatpush1.bf16.msra.mxu0 %v1132
      %1277 = vmatprep.mubr.bf16.mxu0 %v734
      %1278 = vmatmul.mubr.bf16.gmra.mrb[0].mxu0 %v733
      %v1279 = vpop.f32.mrb[0].mxu0
      %v1280 = vadd.f32 0.0, %v1279
      %v1281 = vpop.f32.mrb[0].mxu0
      %v1282 = vpop.f32.mrb[0].mxu0
      %v1283 = vadd.f32 0.0, %v1282
      %v1284 = vpop.f32.mrb[0].mxu0
      %1285 = vmatprep.mubr.bf16.mxu0 %v742
      %1286 = vmatmul.mubr.bf16.gmra.mrb[0].mxu0 %v741
      %v1287 = vpop.f32.mrb[0].mxu0
      %v1288 = vadd.f32 0.0, %v1287
      %v1289 = vpop.f32.mrb[0].mxu0
      %v1290 = vpop.f32.mrb[0].mxu0
      %v1291 = vadd.f32 0.0, %v1290
      %v1292 = vpop.f32.mrb[0].mxu0
      %1293 = vmatprep.mubr.bf16.mxu0 %v750
      %1294 = vmatmul.mubr.bf16.gmra.mrb[0].mxu0 %v749
      %v1295 = vpop.f32.mrb[0].mxu0
      %v1296 = vadd.f32 0.0, %v1295
      %v1297 = vpop.f32.mrb[0].mxu0
      %v1298 = vpop.f32.mrb[0].mxu0
      %v1299 = vadd.f32 0.0, %v1298
      %v1300 = vpop.f32.mrb[0].mxu0
      %1301 = vmatprep.mubr.bf16.mxu0 %v758
      %1302 = vmatmul.mubr.bf16.gmra.mrb[0].mxu0 %v757
      %v1303 = vpop.f32.mrb[0].mxu0
      %v1304 = vadd.f32 0.0, %v1303
      %v1305 = vpop.f32.mrb[0].mxu0
      %v1306 = vpop.f32.mrb[0].mxu0
      %v1307 = vadd.f32 0.0, %v1306
      %v1308 = vpop.f32.mrb[0].mxu0
      %1309 = vmatprep.mubr.bf16.mxu0 %v766
      %1310 = vmatmul.mubr.bf16.gmra.mrb[0].mxu0 %v765
      %v1311 = vpop.f32.mrb[0].mxu0
      %v1312 = vadd.f32 0.0, %v1311
      %v1313 = vpop.f32.mrb[0].mxu0
      %v1314 = vpop.f32.mrb[0].mxu0
      %v1315 = vadd.f32 0.0, %v1314
      %v1316 = vpop.f32.mrb[0].mxu0
      %1317 = vmatprep.mubr.bf16.mxu0 %v774
      %1318 = vmatmul.mubr.bf16.gmra.mrb[0].mxu0 %v773
      %v1319 = vpop.f32.mrb[0].mxu0
      %v1320 = vadd.f32 0.0, %v1319
      %v1321 = vpop.f32.mrb[0].mxu0
      %v1322 = vpop.f32.mrb[0].mxu0
      %v1323 = vadd.f32 0.0, %v1322
      %v1324 = vpop.f32.mrb[0].mxu0
      %1325 = vmatprep.mubr.bf16.mxu0 %v782
      %1326 = vmatmul.mubr.bf16.gmra.mrb[0].mxu0 %v781
      %v1327 = vpop.f32.mrb[0].mxu0
      %v1328 = vadd.f32 0.0, %v1327
      %v1329 = vpop.f32.mrb[0].mxu0
      %v1330 = vpop.f32.mrb[0].mxu0
      %v1331 = vadd.f32 0.0, %v1330
      %v1332 = vpop.f32.mrb[0].mxu0
      %1333 = vmatprep.mubr.bf16.mxu0 %v790
      %1334 = vmatmul.mubr.bf16.gmra.mrb[0].mxu0 %v789
      %v1335 = vpop.f32.mrb[0].mxu0
      %v1336 = vadd.f32 0.0, %v1335
      %v1337 = vpop.f32.mrb[0].mxu0
      %v1338 = vpop.f32.mrb[0].mxu0
      %v1339 = vadd.f32 0.0, %v1338
      %v1340 = vpop.f32.mrb[0].mxu0
      %1341 = vdwg.mxu0
      %1342 = vmatprep.subr.bf16.mxu0 0
      %1343 = vmatpush1.bf16.msra.mxu0 %v1133
      %1344 = vmatprep.subr.bf16.mxu0 0
      %1345 = vmatpush1.bf16.msra.mxu0 %v1134
      %1346 = vmatprep.subr.bf16.mxu0 0
      %1347 = vmatpush1.bf16.msra.mxu0 %v1135
      %1348 = vmatprep.subr.bf16.mxu0 0
      %1349 = vmatpush1.bf16.msra.mxu0 %v1136
      %1350 = vmatprep.subr.bf16.mxu0 0
      %1351 = vmatpush1.bf16.msra.mxu0 %v1137
      %1352 = vmatprep.subr.bf16.mxu0 0
      %1353 = vmatpush1.bf16.msra.mxu0 %v1138
      %1354 = vmatprep.subr.bf16.mxu0 0
      %1355 = vmatpush1.bf16.msra.mxu0 %v1139
      %1356 = vmatprep.subr.bf16.mxu0 0
      %1357 = vmatpush1.bf16.msra.mxu0 %v1140
      %1358 = vmatprep.subr.bf16.mxu0 0
      %1359 = vmatpush1.bf16.msra.mxu0 %v1141
      %1360 = vmatprep.subr.bf16.mxu0 0
      %1361 = vmatpush1.bf16.msra.mxu0 %v1142
      %1362 = vmatprep.subr.bf16.mxu0 0
      %1363 = vmatpush1.bf16.msra.mxu0 %v1143
      %1364 = vmatprep.subr.bf16.mxu0 0
      %1365 = vmatpush1.bf16.msra.mxu0 %v1144
      %1366 = vmatprep.subr.bf16.mxu0 0
      %1367 = vmatpush1.bf16.msra.mxu0 %v1145
      %1368 = vmatprep.subr.bf16.mxu0 0
      %1369 = vmatpush1.bf16.msra.mxu0 %v1146
      %1370 = vmatprep.subr.bf16.mxu0 0
      %1371 = vmatpush1.bf16.msra.mxu0 %v1147
      %1372 = vmatprep.subr.bf16.mxu0 0
      %1373 = vmatpush1.bf16.msra.mxu0 %v1148
      %1374 = vmatprep.mubr.bf16.mxu0 %v736
      %1375 = vmatmul.mubr.bf16.gmra.mrb[0].mxu0 %v735
      %v1376 = vpop.f32.mrb[0].mxu0
      %v1377 = vadd.f32 %v1280, %v1376
      %v1378 = vpop.f32.mrb[0].mxu0
      %v1379 = vpop.f32.mrb[0].mxu0
      %v1380 = vadd.f32 %v1283, %v1379
      %v1381 = vpop.f32.mrb[0].mxu0
      %1382 = vmatprep.mubr.bf16.mxu0 %v744
      %1383 = vmatmul.mubr.bf16.gmra.mrb[0].mxu0 %v743
      %v1384 = vpop.f32.mrb[0].mxu0
      %v1385 = vadd.f32 %v1288, %v1384
      %v1386 = vpop.f32.mrb[0].mxu0
      %v1387 = vpop.f32.mrb[0].mxu0
      %v1388 = vadd.f32 %v1291, %v1387
      %v1389 = vpop.f32.mrb[0].mxu0
      %1390 = vmatprep.mubr.bf16.mxu0 %v752
      %1391 = vmatmul.mubr.bf16.gmra.mrb[0].mxu0 %v751
      %v1392 = vpop.f32.mrb[0].mxu0
      %v1393 = vadd.f32 %v1296, %v1392
      %v1394 = vpop.f32.mrb[0].mxu0
      %v1395 = vpop.f32.mrb[0].mxu0
      %v1396 = vadd.f32 %v1299, %v1395
      %v1397 = vpop.f32.mrb[0].mxu0
      %1398 = vmatprep.mubr.bf16.mxu0 %v760
      %1399 = vmatmul.mubr.bf16.gmra.mrb[0].mxu0 %v759
      %v1400 = vpop.f32.mrb[0].mxu0
      %v1401 = vadd.f32 %v1304, %v1400
      %v1402 = vpop.f32.mrb[0].mxu0
      %v1403 = vpop.f32.mrb[0].mxu0
      %v1404 = vadd.f32 %v1307, %v1403
      %v1405 = vpop.f32.mrb[0].mxu0
      %1406 = vmatprep.mubr.bf16.mxu0 %v768
      %1407 = vmatmul.mubr.bf16.gmra.mrb[0].mxu0 %v767
      %v1408 = vpop.f32.mrb[0].mxu0
      %v1409 = vadd.f32 %v1312, %v1408
      %v1410 = vpop.f32.mrb[0].mxu0
      %v1411 = vpop.f32.mrb[0].mxu0
      %v1412 = vadd.f32 %v1315, %v1411
      %v1413 = vpop.f32.mrb[0].mxu0
      %1414 = vmatprep.mubr.bf16.mxu0 %v776
      %1415 = vmatmul.mubr.bf16.gmra.mrb[0].mxu0 %v775
      %v1416 = vpop.f32.mrb[0].mxu0
      %v1417 = vadd.f32 %v1320, %v1416
      %v1418 = vpop.f32.mrb[0].mxu0
      %v1419 = vpop.f32.mrb[0].mxu0
      %v1420 = vadd.f32 %v1323, %v1419
      %v1421 = vpop.f32.mrb[0].mxu0
      %1422 = vmatprep.mubr.bf16.mxu0 %v784
      %1423 = vmatmul.mubr.bf16.gmra.mrb[0].mxu0 %v783
      %v1424 = vpop.f32.mrb[0].mxu0
      %v1425 = vadd.f32 %v1328, %v1424
      %v1426 = vpop.f32.mrb[0].mxu0
      %v1427 = vpop.f32.mrb[0].mxu0
      %v1428 = vadd.f32 %v1331, %v1427
      %v1429 = vpop.f32.mrb[0].mxu0
      %1430 = vmatprep.mubr.bf16.mxu0 %v792
      %1431 = vmatmul.mubr.bf16.gmra.mrb[0].mxu0 %v791
      %v1432 = vpop.f32.mrb[0].mxu0
      %v1433 = vadd.f32 %v1336, %v1432
      %v1434 = vpop.f32.mrb[0].mxu0
      %v1435 = vpop.f32.mrb[0].mxu0
      %v1436 = vadd.f32 %v1339, %v1435
      %v1437 = vpop.f32.mrb[0].mxu0
      %1438 = vdwg.mxu0
      %1439 = vmatprep.subr.bf16.mxu0 0
      %1440 = vmatpush1.bf16.msra.mxu0 %v1149
      %1441 = vmatprep.subr.bf16.mxu0 0
      %1442 = vmatpush1.bf16.msra.mxu0 %v1150
      %1443 = vmatprep.subr.bf16.mxu0 0
      %1444 = vmatpush1.bf16.msra.mxu0 %v1151
      %1445 = vmatprep.subr.bf16.mxu0 0
      %1446 = vmatpush1.bf16.msra.mxu0 %v1152
      %1447 = vmatprep.subr.bf16.mxu0 0
      %1448 = vmatpush1.bf16.msra.mxu0 %v1153
      %1449 = vmatprep.subr.bf16.mxu0 0
      %1450 = vmatpush1.bf16.msra.mxu0 %v1154
      %1451 = vmatprep.subr.bf16.mxu0 0
      %1452 = vmatpush1.bf16.msra.mxu0 %v1155
      %1453 = vmatprep.subr.bf16.mxu0 0
      %1454 = vmatpush1.bf16.msra.mxu0 %v1156
      %1455 = vmatprep.subr.bf16.mxu0 0
      %1456 = vmatpush1.bf16.msra.mxu0 %v1157
      %1457 = vmatprep.subr.bf16.mxu0 0
      %1458 = vmatpush1.bf16.msra.mxu0 %v1158
      %1459 = vmatprep.subr.bf16.mxu0 0
      %1460 = vmatpush1.bf16.msra.mxu0 %v1159
      %1461 = vmatprep.subr.bf16.mxu0 0
      %1462 = vmatpush1.bf16.msra.mxu0 %v1160
      %1463 = vmatprep.subr.bf16.mxu0 0
      %1464 = vmatpush1.bf16.msra.mxu0 %v1161
      %1465 = vmatprep.subr.bf16.mxu0 0
      %1466 = vmatpush1.bf16.msra.mxu0 %v1162
      %1467 = vmatprep.subr.bf16.mxu0 0
      %1468 = vmatpush1.bf16.msra.mxu0 %v1163
      %1469 = vmatprep.subr.bf16.mxu0 0
      %1470 = vmatpush1.bf16.msra.mxu0 %v1164
      %1471 = vmatprep.mubr.bf16.mxu0 %v738
      %1472 = vmatmul.mubr.bf16.gmra.mrb[0].mxu0 %v737
      %v1473 = vpop.f32.mrb[0].mxu0
      %v1474 = vadd.f32 %v1377, %v1473
      %v1475 = vpop.f32.mrb[0].mxu0
      %v1476 = vpop.f32.mrb[0].mxu0
      %v1477 = vadd.f32 %v1380, %v1476
      %v1478 = vpop.f32.mrb[0].mxu0
      %1479 = vmatprep.mubr.bf16.mxu0 %v746
      %1480 = vmatmul.mubr.bf16.gmra.mrb[0].mxu0 %v745
      %v1481 = vpop.f32.mrb[0].mxu0
      %v1482 = vadd.f32 %v1385, %v1481
      %v1483 = vpop.f32.mrb[0].mxu0
      %v1484 = vpop.f32.mrb[0].mxu0
      %v1485 = vadd.f32 %v1388, %v1484
      %v1486 = vpop.f32.mrb[0].mxu0
      %1487 = vmatprep.mubr.bf16.mxu0 %v754
      %1488 = vmatmul.mubr.bf16.gmra.mrb[0].mxu0 %v753
      %v1489 = vpop.f32.mrb[0].mxu0
      %v1490 = vadd.f32 %v1393, %v1489
      %v1491 = vpop.f32.mrb[0].mxu0
      %v1492 = vpop.f32.mrb[0].mxu0
      %v1493 = vadd.f32 %v1396, %v1492
      %v1494 = vpop.f32.mrb[0].mxu0
      %1495 = vmatprep.mubr.bf16.mxu0 %v762
      %1496 = vmatmul.mubr.bf16.gmra.mrb[0].mxu0 %v761
      %v1497 = vpop.f32.mrb[0].mxu0
      %v1498 = vadd.f32 %v1401, %v1497
      %v1499 = vpop.f32.mrb[0].mxu0
      %v1500 = vpop.f32.mrb[0].mxu0
      %v1501 = vadd.f32 %v1404, %v1500
      %v1502 = vpop.f32.mrb[0].mxu0
      %1503 = vmatprep.mubr.bf16.mxu0 %v770
      %1504 = vmatmul.mubr.bf16.gmra.mrb[0].mxu0 %v769
      %v1505 = vpop.f32.mrb[0].mxu0
      %v1506 = vadd.f32 %v1409, %v1505
      %v1507 = vpop.f32.mrb[0].mxu0
      %v1508 = vpop.f32.mrb[0].mxu0
      %v1509 = vadd.f32 %v1412, %v1508
      %v1510 = vpop.f32.mrb[0].mxu0
      %1511 = vmatprep.mubr.bf16.mxu0 %v778
      %1512 = vmatmul.mubr.bf16.gmra.mrb[0].mxu0 %v777
      %v1513 = vpop.f32.mrb[0].mxu0
      %v1514 = vadd.f32 %v1417, %v1513
      %v1515 = vpop.f32.mrb[0].mxu0
      %v1516 = vpop.f32.mrb[0].mxu0
      %v1517 = vadd.f32 %v1420, %v1516
      %v1518 = vpop.f32.mrb[0].mxu0
      %1519 = vmatprep.mubr.bf16.mxu0 %v786
      %1520 = vmatmul.mubr.bf16.gmra.mrb[0].mxu0 %v785
      %v1521 = vpop.f32.mrb[0].mxu0
      %v1522 = vadd.f32 %v1425, %v1521
      %v1523 = vpop.f32.mrb[0].mxu0
      %v1524 = vpop.f32.mrb[0].mxu0
      %v1525 = vadd.f32 %v1428, %v1524
      %v1526 = vpop.f32.mrb[0].mxu0
      %1527 = vmatprep.mubr.bf16.mxu0 %v794
      %1528 = vmatmul.mubr.bf16.gmra.mrb[0].mxu0 %v793
      %v1529 = vpop.f32.mrb[0].mxu0
      %v1530 = vadd.f32 %v1433, %v1529
      %v1531 = vpop.f32.mrb[0].mxu0
      %v1532 = vpop.f32.mrb[0].mxu0
      %v1533 = vadd.f32 %v1436, %v1532
      %v1534 = vpop.f32.mrb[0].mxu0
      %1535 = vdwg.mxu0
      %1536 = vmatprep.subr.bf16.mxu0 0
      %1537 = vmatpush1.bf16.msra.mxu0 %v1165
      %1538 = vmatprep.subr.bf16.mxu0 0
      %1539 = vmatpush1.bf16.msra.mxu0 %v1166
      %1540 = vmatprep.subr.bf16.mxu0 0
      %1541 = vmatpush1.bf16.msra.mxu0 %v1167
      %1542 = vmatprep.subr.bf16.mxu0 0
      %1543 = vmatpush1.bf16.msra.mxu0 %v1168
      %1544 = vmatprep.subr.bf16.mxu0 0
      %1545 = vmatpush1.bf16.msra.mxu0 %v1169
      %1546 = vmatprep.subr.bf16.mxu0 0
      %1547 = vmatpush1.bf16.msra.mxu0 %v1170
      %1548 = vmatprep.subr.bf16.mxu0 0
      %1549 = vmatpush1.bf16.msra.mxu0 %v1171
      %1550 = vmatprep.subr.bf16.mxu0 0
      %1551 = vmatpush1.bf16.msra.mxu0 %v1172
      %1552 = vmatprep.subr.bf16.mxu0 0
      %1553 = vmatpush1.bf16.msra.mxu0 %v1173
      %1554 = vmatprep.subr.bf16.mxu0 0
      %1555 = vmatpush1.bf16.msra.mxu0 %v1174
      %1556 = vmatprep.subr.bf16.mxu0 0
      %1557 = vmatpush1.bf16.msra.mxu0 %v1175
      %1558 = vmatprep.subr.bf16.mxu0 0
      %1559 = vmatpush1.bf16.msra.mxu0 %v1176
      %1560 = vmatprep.subr.bf16.mxu0 0
      %1561 = vmatpush1.bf16.msra.mxu0 %v1177
      %1562 = vmatprep.subr.bf16.mxu0 0
      %1563 = vmatpush1.bf16.msra.mxu0 %v1178
      %1564 = vmatprep.subr.bf16.mxu0 0
      %1565 = vmatpush1.bf16.msra.mxu0 %v1179
      %1566 = vmatprep.subr.bf16.mxu0 0
      %1567 = vmatpush1.bf16.msra.mxu0 %v1180
      %1568 = vmatprep.mubr.bf16.mxu0 %v740
      %1569 = vmatmul.mubr.bf16.gmra.mrb[0].mxu0 %v739
      %v1570 = vpop.f32.mrb[0].mxu0
      %v1571 = vadd.f32 %v1474, %v1570
      %v1572 = vpop.f32.mrb[0].mxu0
      %v1573 = vpop.f32.mrb[0].mxu0
      %v1574 = vadd.f32 %v1477, %v1573
      %v1575 = vpop.f32.mrb[0].mxu0
      %1576 = vmatprep.mubr.bf16.mxu0 %v748
      %1577 = vmatmul.mubr.bf16.gmra.mrb[0].mxu0 %v747
      %v1578 = vpop.f32.mrb[0].mxu0
      %v1579 = vadd.f32 %v1482, %v1578
      %v1580 = vpop.f32.mrb[0].mxu0
      %v1581 = vpop.f32.mrb[0].mxu0
      %v1582 = vadd.f32 %v1485, %v1581
      %v1583 = vpop.f32.mrb[0].mxu0
      %1584 = vmatprep.mubr.bf16.mxu0 %v756
      %1585 = vmatmul.mubr.bf16.gmra.mrb[0].mxu0 %v755
      %v1586 = vpop.f32.mrb[0].mxu0
      %v1587 = vadd.f32 %v1490, %v1586
      %v1588 = vpop.f32.mrb[0].mxu0
      %v1589 = vpop.f32.mrb[0].mxu0
      %v1590 = vadd.f32 %v1493, %v1589
      %v1591 = vpop.f32.mrb[0].mxu0
      %1592 = vmatprep.mubr.bf16.mxu0 %v764
      %1593 = vmatmul.mubr.bf16.gmra.mrb[0].mxu0 %v763
      %v1594 = vpop.f32.mrb[0].mxu0
      %v1595 = vadd.f32 %v1498, %v1594
      %v1596 = vpop.f32.mrb[0].mxu0
      %v1597 = vpop.f32.mrb[0].mxu0
      %v1598 = vadd.f32 %v1501, %v1597
      %v1599 = vpop.f32.mrb[0].mxu0
      %1600 = vmatprep.mubr.bf16.mxu0 %v772
      %1601 = vmatmul.mubr.bf16.gmra.mrb[0].mxu0 %v771
      %v1602 = vpop.f32.mrb[0].mxu0
      %v1603 = vadd.f32 %v1506, %v1602
      %v1604 = vpop.f32.mrb[0].mxu0
      %v1605 = vpop.f32.mrb[0].mxu0
      %v1606 = vadd.f32 %v1509, %v1605
      %v1607 = vpop.f32.mrb[0].mxu0
      %1608 = vmatprep.mubr.bf16.mxu0 %v780
      %1609 = vmatmul.mubr.bf16.gmra.mrb[0].mxu0 %v779
      %v1610 = vpop.f32.mrb[0].mxu0
      %v1611 = vadd.f32 %v1514, %v1610
      %v1612 = vpop.f32.mrb[0].mxu0
      %v1613 = vpop.f32.mrb[0].mxu0
      %v1614 = vadd.f32 %v1517, %v1613
      %v1615 = vpop.f32.mrb[0].mxu0
      %1616 = vmatprep.mubr.bf16.mxu0 %v788
      %1617 = vmatmul.mubr.bf16.gmra.mrb[0].mxu0 %v787
      %v1618 = vpop.f32.mrb[0].mxu0
      %v1619 = vadd.f32 %v1522, %v1618
      %v1620 = vpop.f32.mrb[0].mxu0
      %v1621 = vpop.f32.mrb[0].mxu0
      %v1622 = vadd.f32 %v1525, %v1621
      %v1623 = vpop.f32.mrb[0].mxu0
      %1624 = vmatprep.mubr.bf16.mxu0 %v796
      %1625 = vmatmul.mubr.bf16.gmra.mrb[0].mxu0 %v795
      %v1626 = vpop.f32.mrb[0].mxu0
      %v1627 = vadd.f32 %v1530, %v1626
      %v1628 = vpop.f32.mrb[0].mxu0
      %v1629 = vpop.f32.mrb[0].mxu0
      %v1630 = vadd.f32 %v1533, %v1629
      %v1631 = vpop.f32.mrb[0].mxu0
      %1632 = vdwg.mxu0
      %v1633 = vadd.f32 %v333, %v1571
      %v1634 = vadd.f32 %v334, %v1574
      %v1635 = vadd.f32 %v335, %v1579
      %v1636 = vadd.f32 %v336, %v1582
      %v1637 = vadd.f32 %v337, %v1587
      %v1638 = vadd.f32 %v338, %v1590
      %v1639 = vadd.f32 %v339, %v1595
      %v1640 = vadd.f32 %v340, %v1598
      %v1641 = vadd.f32 %v341, %v1603
      %v1642 = vadd.f32 %v342, %v1606
      %v1643 = vadd.f32 %v343, %v1611
      %v1644 = vadd.f32 %v344, %v1614
      %v1645 = vadd.f32 %v345, %v1619
      %v1646 = vadd.f32 %v346, %v1622
      %v1647 = vadd.f32 %v347, %v1627
      %v1648 = vadd.f32 %v348, %v1630
      %1649 = vst [vmem:[#allocation2] sm:$0xff] %v1633
      %1650 = vst [vmem:[#allocation2 + $0x8] sm:$0xff] %v1634
      %1651 = vst [vmem:[#allocation2 + $0x10] sm:$0xff] %v1635
      %1652 = vst [vmem:[#allocation2 + $0x18] sm:$0xff] %v1636
      %1653 = vst [vmem:[#allocation2 + $0x20] sm:$0xff] %v1637
      %1654 = vst [vmem:[#allocation2 + $0x28] sm:$0xff] %v1638
      %1655 = vst [vmem:[#allocation2 + $0x30] sm:$0xff] %v1639
      %1656 = vst [vmem:[#allocation2 + $0x38] sm:$0xff] %v1640
      %1657 = vst [vmem:[#allocation2 + $0x40] sm:$0xff] %v1641
      %1658 = vst [vmem:[#allocation2 + $0x48] sm:$0xff] %v1642
      %1659 = vst [vmem:[#allocation2 + $0x50] sm:$0xff] %v1643
      %1660 = vst [vmem:[#allocation2 + $0x58] sm:$0xff] %v1644
      %1661 = vst [vmem:[#allocation2 + $0x60] sm:$0xff] %v1645
      %1662 = vst [vmem:[#allocation2 + $0x68] sm:$0xff] %v1646
      %1663 = vst [vmem:[#allocation2 + $0x70] sm:$0xff] %v1647
      %1664 = vst [vmem:[#allocation2 + $0x78] sm:$0xff] %v1648
      // Predicated region
      $region37: #{unet_up_forward.2} parent=31 // pred_check
        %p1665 = pneg %p313
      $region38: #{unet_up_forward.2} parent=31 // pred_check_branch
        %1667 = sbr.rel (%p1665) target = $region40
      $region39: #{unet_up_forward.2} parent=31 // pred_region
        %v1668 = vld [vmem:[#allocation2] sm:$0xff]
        %v1669 = vld [vmem:[#allocation2 + $0x8] sm:$0xff]
        %v1670 = vld [vmem:[#allocation2 + $0x10] sm:$0xff]
        %v1671 = vld [vmem:[#allocation2 + $0x18] sm:$0xff]
        %v1672 = vld [vmem:[#allocation2 + $0x20] sm:$0xff]
        %v1673 = vld [vmem:[#allocation2 + $0x28] sm:$0xff]
        %v1674 = vld [vmem:[#allocation2 + $0x30] sm:$0xff]
        %v1675 = vld [vmem:[#allocation2 + $0x38] sm:$0xff]
        %v1676 = vld [vmem:[#allocation2 + $0x40] sm:$0xff]
        %v1677 = vld [vmem:[#allocation2 + $0x48] sm:$0xff]
        %v1678 = vld [vmem:[#allocation2 + $0x50] sm:$0xff]
        %v1679 = vld [vmem:[#allocation2 + $0x58] sm:$0xff]
        %v1680 = vld [vmem:[#allocation2 + $0x60] sm:$0xff]
        %v1681 = vld [vmem:[#allocation2 + $0x68] sm:$0xff]
        %v1682 = vld [vmem:[#allocation2 + $0x70] sm:$0xff]
        %v1683 = vld [vmem:[#allocation2 + $0x78] sm:$0xff]
        %v1684 = vld [vmem:[%s298] sm:$0x1]
        %v1686 = vlaneseq
        %v1687 = vshrl.u32 %v1686, 7
        %v1688 = vsub.s32 0, %v1687
        %v1689 = vrot.slane %v1684, %v1688
        %v1691 = vadd.f32 %v1668, %v1689
        %v1692 = vadd.f32 %v1669, %v1689
        %v1693 = vadd.f32 %v1670, %v1689
        %v1694 = vadd.f32 %v1671, %v1689
        %v1695 = vadd.f32 %v1672, %v1689
        %v1696 = vadd.f32 %v1673, %v1689
        %v1697 = vadd.f32 %v1674, %v1689
        %v1698 = vadd.f32 %v1675, %v1689
        %v1699 = vadd.f32 %v1676, %v1689
        %v1700 = vadd.f32 %v1677, %v1689
        %v1701 = vadd.f32 %v1678, %v1689
        %v1702 = vadd.f32 %v1679, %v1689
        %v1703 = vadd.f32 %v1680, %v1689
        %v1704 = vadd.f32 %v1681, %v1689
        %v1705 = vadd.f32 %v1682, %v1689
        %v1706 = vadd.f32 %v1683, %v1689
        %1707 = vst [vmem:[%s310] sm:$0xff] %v1691
        %1708 = vst [vmem:[%s310 + $0x8] sm:$0xff] %v1692
        %1709 = vst [vmem:[%s310 + $0x10] sm:$0xff] %v1693
        %1710 = vst [vmem:[%s310 + $0x18] sm:$0xff] %v1694
        %1711 = vst [vmem:[%s310 + $0x20] sm:$0xff] %v1695
        %1712 = vst [vmem:[%s310 + $0x28] sm:$0xff] %v1696
        %1713 = vst [vmem:[%s310 + $0x30] sm:$0xff] %v1697
        %1714 = vst [vmem:[%s310 + $0x38] sm:$0xff] %v1698
        %1715 = vst [vmem:[%s310 + $0x40] sm:$0xff] %v1699
        %1716 = vst [vmem:[%s310 + $0x48] sm:$0xff] %v1700
        %1717 = vst [vmem:[%s310 + $0x50] sm:$0xff] %v1701
        %1718 = vst [vmem:[%s310 + $0x58] sm:$0xff] %v1702
        %1719 = vst [vmem:[%s310 + $0x60] sm:$0xff] %v1703
        %1720 = vst [vmem:[%s310 + $0x68] sm:$0xff] %v1704
        %1721 = vst [vmem:[%s310 + $0x70] sm:$0xff] %v1705
        %1722 = vst [vmem:[%s310 + $0x78] sm:$0xff] %v1706
      $region40: #{unet_up_forward.2} parent=31 // pred_fallthru
        _
      %s1723 = smul.u32 16, %s21
      %p1724 = scmp.lt.s32.totalorder %s20, 3
      %s1725 = scalar_select %p1724, %s20, 3
      %p1726 = scmp.lt.s32.totalorder %s1723, 15
      %s1727 = scalar_select %p1726, %s1723, 15
      %p1728 = scmp.lt.s32.totalorder %s22, 0
      %s1729 = scalar_select %p1728, %s22, 0
      %s1730 = sadd.s32 %s1729, %s1727
      %s1731 = smul.addr %s1725, 16
      %s1732 = sadd.s32 %s1730, %s1731
      %s1733 = smul.addr %s1732, 8
      %s1734 = scalar_lea.vmem %s3, %s1733
      // Predicated region
      $region41: #{unet_up_forward.2} parent=31 // pred_check
        %p1735 = pneg %p148
      $region42: #{unet_up_forward.2} parent=31 // pred_check_branch
        %1737 = sbr.rel (%p1735) target = $region44
      $region43: #{unet_up_forward.2} parent=31 // pred_region
        %s1738 = smul.u32 16, %s21
      $region44: #{unet_up_forward.2} parent=31 // pred_fallthru
        _
    $region32: #{unet_up_forward.2} parent=5 // pred_fallthru
      _
    %p1739 = scmp.le.s32.totalorder 2, %s9
    // Predicated region
    $region45: #{unet_up_forward.2} parent=5 // pred_check
      %p1740 = pneg %p1739
    $region46: #{unet_up_forward.2} parent=5 // pred_check_branch
      %1742 = sbr.rel (%p1740) target = $region48
    $region47: #{unet_up_forward.2} parent=5 // pred_region
      %s1743 = ssub.s32 %s9, 2
      // Predicated region
      $region49: #{unet_up_forward.2} parent=47 // pred_check
        %p1744 = pneg %p154
      $region50: #{unet_up_forward.2} parent=47 // pred_check_branch
        %1746 = sbr.rel (%p1744) target = $region52
      $region51: #{unet_up_forward.2} parent=47 // pred_region
        %s1747 = smul.u32 16, %s25
        %p1748 = scmp.lt.s32.totalorder %s24, 3
        %s1749 = scalar_select %p1748, %s24, 3
        %p1750 = scmp.lt.s32.totalorder %s1747, 15
        %s1751 = scalar_select %p1750, %s1747, 15
        %p1752 = scmp.lt.s32.totalorder %s26, 0
        %s1753 = scalar_select %p1752, %s26, 0
        %s1754 = sadd.s32 %s1753, %s1751
        %s1755 = smul.addr %s1749, 16
        %s1756 = sadd.s32 %s1754, %s1755
        %s1757 = smul.addr %s1756, 8
        %s1758 = scalar_lea.vmem %s3, %s1757
      $region52: #{unet_up_forward.2} parent=47 // pred_fallthru
        _
    $region48: #{unet_up_forward.2} parent=5 // pred_fallthru
      _
  $region6: #{unet_up_forward.2} parent=0 // loop_footer
    %s13 = sadd.s32 1, %s9
  $region7: #{unet_up_forward.2} parent=0 // loop_footer_branch
    %8 = sbr.rel target = $region3
  $region8: #{unet_up_forward.2} parent=0 // loop_exit
    _

</llo_original>
